<compile_context>
chip_gen: v5e
topology: v5e:2x2
jax: 0.10.0
libtpu: 0.0.40
codegen_flags: <defaults>
</compile_context>

<pallas_src>
import functools

import jax
import jax.numpy as jnp
from jax.experimental import pallas as pl
from jax.experimental.pallas import tpu as pltpu

_VMEM_LIMIT = 48 * 1024 * 1024  # stays inside v7x's 64 MiB physical VMEM with headroom


def _conv_tile(x_slab, w_taps, *, k, th, wo, stride):
    """Implicit-GEMM conv for one spatial tile.

    x_slab : (th_in, Wp, Cin) f32  -- padded input rows covering this tile + halo
    w_taps : (k, k, Cin, Cout) f32
    returns (th*wo, Cout) f32 accumulator.
    """
    rows = th * wo
    cout = w_taps.shape[-1]
    acc = jnp.zeros((rows, cout), jnp.float32)
    for di in range(k):
        for dj in range(k):
            xt = x_slab[di:di + (th - 1) * stride + 1:stride,
                        dj:dj + (wo - 1) * stride + 1:stride, :]   # (th, wo, Cin)
            xt = xt.reshape(rows, -1)                              # (rows, Cin)
            acc = acc + jnp.dot(xt, w_taps[di, dj],
                                preferred_element_type=jnp.float32)
    return acc


def _stats_kernel(x_ref, w_ref, sum_ref, sqs_ref, *, k, th, wo, stride):
    """Pass 1: per-image per-channel sum / sum-of-squares of the conv output."""
    @pl.when(pl.program_id(1) == 0)
    def _():
        sum_ref[...] = jnp.zeros_like(sum_ref)
        sqs_ref[...] = jnp.zeros_like(sqs_ref)

    acc = _conv_tile(x_ref[0, 0], w_ref[...], k=k, th=th, wo=wo, stride=stride)
    # Per-channel reductions on the MXU (huge slack at these shapes); keeps the
    # XLU/VPU free and writes the (8, Cout) accumulator block directly.
    ones8 = jnp.ones((8, acc.shape[0]), jnp.float32)
    sum_ref[0] = sum_ref[0] + jnp.dot(ones8, acc,
                                      preferred_element_type=jnp.float32)
    sqs_ref[0] = sqs_ref[0] + jnp.dot(ones8, acc * acc,
                                      preferred_element_type=jnp.float32)


def _conv_bn_mish_kernel(x_ref, w_ref, scale_ref, shift_ref, o_ref,
                         *, k, th, wo, stride):
    """Pass 2: conv (recomputed) + affine BN + Mish, lane-dense (Cout, rows) output."""
    acc = _conv_tile(x_ref[0, 0], w_ref[...], k=k, th=th, wo=wo, stride=stride)
    y = acc.T * scale_ref[...] + shift_ref[...]          # (Cout, rows), lane-dense
    # mish(y) = y * tanh(softplus(y)) = y * u / (u + 2), u = e^y * (e^y + 2).
    # Single exp + approx reciprocal; clamp: mish(y) ~= y for y > 20.
    t = jnp.exp(jnp.minimum(y, 20.0))
    u = t * (t + 2.0)
    mish = y * u * pl.reciprocal(u + 2.0, approx=True)
    o_ref[0] = jnp.where(y > 20.0, y, mish).astype(o_ref.dtype)


def _pick_tile_h(ho, wo, target_rows=1024):
    """Divisor of Ho whose tile row-count (th*Wo) is a multiple of 128 (lane-dense
    output blocks), closest to target_rows; falls back to the whole image."""
    cands = [th for th in range(1, ho + 1)
             if ho % th == 0 and ((th * wo) % 128 == 0 or th == ho)]
    return min(cands, key=lambda th: (abs(th * wo - target_rows), th))


def conv_unit_forward(x_nchw, conv_w, gamma, beta, *, stride=1, eps=1e-5):
    N, Cin, H, W = x_nchw.shape
    Cout, _, k, _ = conv_w.shape
    p = k // 2
    Ho = (H + 2 * p - k) // stride + 1
    Wo = (W + 2 * p - k) // stride + 1

    # NHWC padded view; channels ride the lane axis inside the kernels.
    x_nhwc = jnp.transpose(x_nchw, (0, 2, 3, 1)).astype(jnp.float32)
    xp = jnp.pad(x_nhwc, ((0, 0), (p, p), (p, p), (0, 0)))
    Wp = W + 2 * p

    th = _pick_tile_h(Ho, Wo)
    n_h = Ho // th
    th_in = (th - 1) * stride + k          # input rows per tile (incl. halo)
    rows = th * Wo

    # Tile-granularity halo duplication (~(k-stride)/(th*stride) overhead vs. the
    # ~k*k inflation of a full im2col). When n_h == 1 this is just a reshape.
    # TODO(synk): replace with manual halo DMA (memory_space=pl.ANY + make_async_copy)
    # to drop even this copy for very large inputs.
    slabs = jnp.stack([xp[:, i * th * stride: i * th * stride + th_in]
                       for i in range(n_h)], axis=1)   # (N, n_h, th_in, Wp, Cin)

    # PyTorch (Cout, Cin, kh, kw) -> (kh, kw, Cin, Cout) per-tap weight slices.
    w_taps = jnp.transpose(conv_w, (2, 3, 1, 0)).astype(jnp.float32)

    slab_spec = pl.BlockSpec((1, 1, th_in, Wp, Cin), lambda n, i: (n, i, 0, 0, 0))
    w_spec = pl.BlockSpec((k, k, Cin, Cout), lambda n, i: (0, 0, 0, 0))

    # ---- pass 1: batch statistics (per-image partials; N axis megacore-parallel) ----
    stats_kernel = functools.partial(_stats_kernel, k=k, th=th, wo=Wo, stride=stride)
    sums, sqs = pl.pallas_call(
        stats_kernel,
        out_shape=(jax.ShapeDtypeStruct((N, 8, Cout), jnp.float32),
                   jax.ShapeDtypeStruct((N, 8, Cout), jnp.float32)),
        grid=(N, n_h),
        in_specs=[slab_spec, w_spec],
        out_specs=(pl.BlockSpec((1, 8, Cout), lambda n, i: (n, 0, 0)),
                   pl.BlockSpec((1, 8, Cout), lambda n, i: (n, 0, 0))),
        compiler_params=pltpu.CompilerParams(
            dimension_semantics=("parallel", "arbitrary"),
            vmem_limit_bytes=_VMEM_LIMIT),
    )(slabs, w_taps)

    # BatchNorm2d training-mode semantics: batch mean / biased variance over (N,H,W).
    # (Running-stat buffer updates are a side effect, not part of the output.)
    count = N * Ho * Wo
    s = jnp.sum(sums[:, 0, :], axis=0)
    q = jnp.sum(sqs[:, 0, :], axis=0)
    mean = s / count
    var = jnp.maximum(q / count - mean * mean, 0.0)    # clamp cancellation error
    inv_std = jax.lax.rsqrt(var + eps)
    g = gamma.astype(jnp.float32)
    scale = (g * inv_std).reshape(Cout, 1)
    shift = (beta.astype(jnp.float32) - mean * g * inv_std).reshape(Cout, 1)

    # ---- pass 2: fused conv + BN + Mish, lane-dense NCHW-ordered output ----
    bn_kernel = functools.partial(_conv_bn_mish_kernel, k=k, th=th, wo=Wo,
                                  stride=stride)
    out_flat = pl.pallas_call(
        bn_kernel,
        out_shape=jax.ShapeDtypeStruct((N, Cout, Ho * Wo), jnp.float32),
        grid=(N, n_h),
        in_specs=[slab_spec, w_spec,
                  pl.BlockSpec((Cout, 1), lambda n, i: (0, 0)),
                  pl.BlockSpec((Cout, 1), lambda n, i: (0, 0))],
        out_specs=pl.BlockSpec((1, Cout, rows), lambda n, i: (n, 0, i)),
        compiler_params=pltpu.CompilerParams(
            dimension_semantics=("parallel", "parallel"),
            vmem_limit_bytes=_VMEM_LIMIT),
    )(slabs, w_taps, scale, shift)

    return out_flat.reshape(N, Cout, Ho, Wo)           # already in NCHW order


if __name__ == "__main__":
    key = jax.random.PRNGKey(0)
    k_x, k_w = jax.random.split(key)

    # ConvUnit(in_channels=4, out_channels=8, kernel_size=3, stride=1)
    N, Cin, Cout, H, W, ksz = 2, 4, 8, 16, 16, 3

    x = jax.random.normal(k_x, (N, Cin, H, W), dtype=jnp.float32)
    conv_w = jax.random.normal(k_w, (Cout, Cin, ksz, ksz), dtype=jnp.float32) * 0.1
    gamma = jnp.ones((Cout,), jnp.float32)   # BatchNorm2d default weight init
    beta = jnp.zeros((Cout,), jnp.float32)   # BatchNorm2d default bias init

    y = conv_unit_forward(x, conv_w, gamma, beta, stride=1)
    jax.block_until_ready(y)
    assert y.shape == (N, Cout, H, W)

    # Pure-JAX reference of the same forward (train-mode BN + Mish), loose tol to
    # cover the approx-reciprocal in the Mish path.
    ref = jax.lax.conv_general_dilated(
        x, conv_w, window_strides=(1, 1), padding=[(1, 1), (1, 1)],
        dimension_numbers=("NCHW", "OIHW", "NCHW"))
    m = ref.mean(axis=(0, 2, 3), keepdims=True)
    v = ref.var(axis=(0, 2, 3), keepdims=True)
    refn = (ref - m) / jnp.sqrt(v + 1e-5) * gamma.reshape(1, -1, 1, 1) \
        + beta.reshape(1, -1, 1, 1)
    refn = refn * jnp.tanh(jax.nn.softplus(refn))
    assert jnp.allclose(y, refn, rtol=2e-2, atol=2e-2)

    print("KERNEL_OK")
</pallas_src>

<mosaic_0001>
module attributes {stable_mosaic.version = 11 : i64} {
  func.func @_stats_kernel(%arg0: i32, %arg1: i32, %arg2: memref<1x1x18x18x4xf32, #tpu.memory_space<vmem>>, %arg3: memref<3x3x4x8xf32, #tpu.memory_space<vmem>>, %arg4: memref<1x8x8xf32, #tpu.memory_space<vmem>>, %arg5: memref<1x8x8xf32, #tpu.memory_space<vmem>>) attributes {dimension_semantics = [#tpu.dimension_semantics<parallel>, #tpu.dimension_semantics<arbitrary>], iteration_bounds = array<i64: 2, 1>, scalar_prefetch = 0 : i64, scratch_operands = 0 : i64, tpu.core_type = #tpu.core_type<tc>, window_params = [{transform_indices = @transform_0, window_bounds = array<i64: 1, 1, 18, 18, 4>}, {pipeline_mode = #tpu.pipeline_mode<synchronous>, transform_indices = @transform_1, window_bounds = array<i64: 3, 3, 4, 8>}, {transform_indices = @transform_2, window_bounds = array<i64: 1, 8, 8>}, {transform_indices = @transform_3, window_bounds = array<i64: 1, 8, 8>}]} {
    %c0_i32 = arith.constant 0 : i32
    %0 = arith.cmpi eq, %arg1, %c0_i32 : i32
    %1 = arith.extui %0 : i1 to i32
    %c0_i32_0 = arith.constant 0 : i32
    %2 = arith.cmpi ne, %1, %c0_i32_0 : i32
    scf.if %2 {
      %cst_33 = arith.constant 0.000000e+00 : f32
      %77 = vector.broadcast %cst_33 : f32 to vector<1x8x8xf32>
      %c0_34 = arith.constant 0 : index
      %c0_35 = arith.constant 0 : index
      %c0_36 = arith.constant 0 : index
      %78 = vector.load %arg4[%c0_34, %c0_35, %c0_36] : memref<1x8x8xf32, #tpu.memory_space<vmem>>, vector<1x8x8xf32>
      tpu.vector_store %arg4[%c0_34, %c0_35, %c0_36], %77 {strides = array<i32>} : memref<1x8x8xf32, #tpu.memory_space<vmem>>, vector<1x8x8xf32>,
      %cst_37 = arith.constant 0.000000e+00 : f32
      %79 = vector.broadcast %cst_37 : f32 to vector<1x8x8xf32>
      %c0_38 = arith.constant 0 : index
      %c0_39 = arith.constant 0 : index
      %c0_40 = arith.constant 0 : index
      %80 = vector.load %arg5[%c0_38, %c0_39, %c0_40] : memref<1x8x8xf32, #tpu.memory_space<vmem>>, vector<1x8x8xf32>
      tpu.vector_store %arg5[%c0_38, %c0_39, %c0_40], %79 {strides = array<i32>} : memref<1x8x8xf32, #tpu.memory_space<vmem>>, vector<1x8x8xf32>,
    } else {
    }
    %c0 = arith.constant 0 : index
    %c0_1 = arith.constant 0 : index
    %c0_2 = arith.constant 0 : index
    %c0_3 = arith.constant 0 : index
    %c0_4 = arith.constant 0 : index
    %3 = vector.load %arg2[%c0, %c0_1, %c0_2, %c0_3, %c0_4] : memref<1x1x18x18x4xf32, #tpu.memory_space<vmem>>, vector<1x1x18x18x4xf32>
    %4 = vector.shape_cast %3 : vector<1x1x18x18x4xf32> to vector<18x18x4xf32>
    %c0_5 = arith.constant 0 : index
    %c0_6 = arith.constant 0 : index
    %c0_7 = arith.constant 0 : index
    %c0_8 = arith.constant 0 : index
    %5 = vector.load %arg3[%c0_5, %c0_6, %c0_7, %c0_8] : memref<3x3x4x8xf32, #tpu.memory_space<vmem>>, vector<3x3x4x8xf32>
    %cst = arith.constant 0.000000e+00 : f32
    %6 = vector.broadcast %cst : f32 to vector<256x8xf32>
    %7 = vector.extract_strided_slice %4 {offsets = [0, 0, 0], sizes = [16, 16, 4], strides = [1, 1, 1]} : vector<18x18x4xf32> to vector<16x16x4xf32>
    %8 = vector.shape_cast %7 : vector<16x16x4xf32> to vector<256x4xf32>
    %9 = vector.extract_strided_slice %5 {offsets = [0, 0, 0, 0], sizes = [1, 1, 4, 8], strides = [1, 1, 1, 1]} : vector<3x3x4x8xf32> to vector<1x1x4x8xf32>
    %10 = vector.shape_cast %9 : vector<1x1x4x8xf32> to vector<4x8xf32>
    %cst_9 = arith.constant dense<0.000000e+00> : vector<256x8xf32>
    %11 = tpu.matmul %8, %10, %cst_9 {dimension_numbers = #tpu.dot_dimension_numbers<[1], [0], [0], [1], [0, 0, 1, 1], [], []>} : vector<256x4xf32>, vector<4x8xf32>, vector<256x8xf32> -> vector<256x8xf32>
    %12 = arith.addf %6, %11 : vector<256x8xf32>
    %13 = vector.extract_strided_slice %4 {offsets = [0, 1, 0], sizes = [16, 16, 4], strides = [1, 1, 1]} : vector<18x18x4xf32> to vector<16x16x4xf32>
    %14 = vector.shape_cast %13 : vector<16x16x4xf32> to vector<256x4xf32>
    %15 = vector.extract_strided_slice %5 {offsets = [0, 1, 0, 0], sizes = [1, 1, 4, 8], strides = [1, 1, 1, 1]} : vector<3x3x4x8xf32> to vector<1x1x4x8xf32>
    %16 = vector.shape_cast %15 : vector<1x1x4x8xf32> to vector<4x8xf32>
    %cst_10 = arith.constant dense<0.000000e+00> : vector<256x8xf32>
    %17 = tpu.matmul %14, %16, %cst_10 {dimension_numbers = #tpu.dot_dimension_numbers<[1], [0], [0], [1], [0, 0, 1, 1], [], []>} : vector<256x4xf32>, vector<4x8xf32>, vector<256x8xf32> -> vector<256x8xf32>
    %18 = arith.addf %12, %17 : vector<256x8xf32>
    %19 = vector.extract_strided_slice %4 {offsets = [0, 2, 0], sizes = [16, 16, 4], strides = [1, 1, 1]} : vector<18x18x4xf32> to vector<16x16x4xf32>
    %20 = vector.shape_cast %19 : vector<16x16x4xf32> to vector<256x4xf32>
    %21 = vector.extract_strided_slice %5 {offsets = [0, 2, 0, 0], sizes = [1, 1, 4, 8], strides = [1, 1, 1, 1]} : vector<3x3x4x8xf32> to vector<1x1x4x8xf32>
    %22 = vector.shape_cast %21 : vector<1x1x4x8xf32> to vector<4x8xf32>
    %cst_11 = arith.constant dense<0.000000e+00> : vector<256x8xf32>
    %23 = tpu.matmul %20, %22, %cst_11 {dimension_numbers = #tpu.dot_dimension_numbers<[1], [0], [0], [1], [0, 0, 1, 1], [], []>} : vector<256x4xf32>, vector<4x8xf32>, vector<256x8xf32> -> vector<256x8xf32>
    %24 = arith.addf %18, %23 : vector<256x8xf32>
    %25 = vector.extract_strided_slice %4 {offsets = [1, 0, 0], sizes = [16, 16, 4], strides = [1, 1, 1]} : vector<18x18x4xf32> to vector<16x16x4xf32>
    %26 = vector.shape_cast %25 : vector<16x16x4xf32> to vector<256x4xf32>
    %27 = vector.extract_strided_slice %5 {offsets = [1, 0, 0, 0], sizes = [1, 1, 4, 8], strides = [1, 1, 1, 1]} : vector<3x3x4x8xf32> to vector<1x1x4x8xf32>
    %28 = vector.shape_cast %27 : vector<1x1x4x8xf32> to vector<4x8xf32>
    %cst_12 = arith.constant dense<0.000000e+00> : vector<256x8xf32>
    %29 = tpu.matmul %26, %28, %cst_12 {dimension_numbers = #tpu.dot_dimension_numbers<[1], [0], [0], [1], [0, 0, 1, 1], [], []>} : vector<256x4xf32>, vector<4x8xf32>, vector<256x8xf32> -> vector<256x8xf32>
    %30 = arith.addf %24, %29 : vector<256x8xf32>
    %31 = vector.extract_strided_slice %4 {offsets = [1, 1, 0], sizes = [16, 16, 4], strides = [1, 1, 1]} : vector<18x18x4xf32> to vector<16x16x4xf32>
    %32 = vector.shape_cast %31 : vector<16x16x4xf32> to vector<256x4xf32>
    %33 = vector.extract_strided_slice %5 {offsets = [1, 1, 0, 0], sizes = [1, 1, 4, 8], strides = [1, 1, 1, 1]} : vector<3x3x4x8xf32> to vector<1x1x4x8xf32>
    %34 = vector.shape_cast %33 : vector<1x1x4x8xf32> to vector<4x8xf32>
    %cst_13 = arith.constant dense<0.000000e+00> : vector<256x8xf32>
    %35 = tpu.matmul %32, %34, %cst_13 {dimension_numbers = #tpu.dot_dimension_numbers<[1], [0], [0], [1], [0, 0, 1, 1], [], []>} : vector<256x4xf32>, vector<4x8xf32>, vector<256x8xf32> -> vector<256x8xf32>
    %36 = arith.addf %30, %35 : vector<256x8xf32>
    %37 = vector.extract_strided_slice %4 {offsets = [1, 2, 0], sizes = [16, 16, 4], strides = [1, 1, 1]} : vector<18x18x4xf32> to vector<16x16x4xf32>
    %38 = vector.shape_cast %37 : vector<16x16x4xf32> to vector<256x4xf32>
    %39 = vector.extract_strided_slice %5 {offsets = [1, 2, 0, 0], sizes = [1, 1, 4, 8], strides = [1, 1, 1, 1]} : vector<3x3x4x8xf32> to vector<1x1x4x8xf32>
    %40 = vector.shape_cast %39 : vector<1x1x4x8xf32> to vector<4x8xf32>
    %cst_14 = arith.constant dense<0.000000e+00> : vector<256x8xf32>
    %41 = tpu.matmul %38, %40, %cst_14 {dimension_numbers = #tpu.dot_dimension_numbers<[1], [0], [0], [1], [0, 0, 1, 1], [], []>} : vector<256x4xf32>, vector<4x8xf32>, vector<256x8xf32> -> vector<256x8xf32>
    %42 = arith.addf %36, %41 : vector<256x8xf32>
    %43 = vector.extract_strided_slice %4 {offsets = [2, 0, 0], sizes = [16, 16, 4], strides = [1, 1, 1]} : vector<18x18x4xf32> to vector<16x16x4xf32>
    %44 = vector.shape_cast %43 : vector<16x16x4xf32> to vector<256x4xf32>
    %45 = vector.extract_strided_slice %5 {offsets = [2, 0, 0, 0], sizes = [1, 1, 4, 8], strides = [1, 1, 1, 1]} : vector<3x3x4x8xf32> to vector<1x1x4x8xf32>
    %46 = vector.shape_cast %45 : vector<1x1x4x8xf32> to vector<4x8xf32>
    %cst_15 = arith.constant dense<0.000000e+00> : vector<256x8xf32>
    %47 = tpu.matmul %44, %46, %cst_15 {dimension_numbers = #tpu.dot_dimension_numbers<[1], [0], [0], [1], [0, 0, 1, 1], [], []>} : vector<256x4xf32>, vector<4x8xf32>, vector<256x8xf32> -> vector<256x8xf32>
    %48 = arith.addf %42, %47 : vector<256x8xf32>
    %49 = vector.extract_strided_slice %4 {offsets = [2, 1, 0], sizes = [16, 16, 4], strides = [1, 1, 1]} : vector<18x18x4xf32> to vector<16x16x4xf32>
    %50 = vector.shape_cast %49 : vector<16x16x4xf32> to vector<256x4xf32>
    %51 = vector.extract_strided_slice %5 {offsets = [2, 1, 0, 0], sizes = [1, 1, 4, 8], strides = [1, 1, 1, 1]} : vector<3x3x4x8xf32> to vector<1x1x4x8xf32>
    %52 = vector.shape_cast %51 : vector<1x1x4x8xf32> to vector<4x8xf32>
    %cst_16 = arith.constant dense<0.000000e+00> : vector<256x8xf32>
    %53 = tpu.matmul %50, %52, %cst_16 {dimension_numbers = #tpu.dot_dimension_numbers<[1], [0], [0], [1], [0, 0, 1, 1], [], []>} : vector<256x4xf32>, vector<4x8xf32>, vector<256x8xf32> -> vector<256x8xf32>
    %54 = arith.addf %48, %53 : vector<256x8xf32>
    %55 = vector.extract_strided_slice %4 {offsets = [2, 2, 0], sizes = [16, 16, 4], strides = [1, 1, 1]} : vector<18x18x4xf32> to vector<16x16x4xf32>
    %56 = vector.shape_cast %55 : vector<16x16x4xf32> to vector<256x4xf32>
    %57 = vector.extract_strided_slice %5 {offsets = [2, 2, 0, 0], sizes = [1, 1, 4, 8], strides = [1, 1, 1, 1]} : vector<3x3x4x8xf32> to vector<1x1x4x8xf32>
    %58 = vector.shape_cast %57 : vector<1x1x4x8xf32> to vector<4x8xf32>
    %cst_17 = arith.constant dense<0.000000e+00> : vector<256x8xf32>
    %59 = tpu.matmul %56, %58, %cst_17 {dimension_numbers = #tpu.dot_dimension_numbers<[1], [0], [0], [1], [0, 0, 1, 1], [], []>} : vector<256x4xf32>, vector<4x8xf32>, vector<256x8xf32> -> vector<256x8xf32>
    %60 = arith.addf %54, %59 : vector<256x8xf32>
    %cst_18 = arith.constant 1.000000e+00 : f32
    %61 = vector.broadcast %cst_18 : f32 to vector<8x256xf32>
    %c0_19 = arith.constant 0 : index
    %c0_20 = arith.constant 0 : index
    %c0_21 = arith.constant 0 : index
    %62 = vector.load %arg4[%c0_19, %c0_20, %c0_21] : memref<1x8x8xf32, #tpu.memory_space<vmem>>, vector<1x8x8xf32>
    %63 = vector.shape_cast %62 : vector<1x8x8xf32> to vector<8x8xf32>
    %cst_22 = arith.constant dense<0.000000e+00> : vector<8x8xf32>
    %64 = tpu.matmul %61, %60, %cst_22 {dimension_numbers = #tpu.dot_dimension_numbers<[1], [0], [0], [1], [0, 0, 1, 1], [], []>} : vector<8x256xf32>, vector<256x8xf32>, vector<8x8xf32> -> vector<8x8xf32>
    %65 = arith.addf %63, %64 : vector<8x8xf32>
    %c0_23 = arith.constant 0 : index
    %c0_24 = arith.constant 0 : index
    %c0_25 = arith.constant 0 : index
    %66 = vector.load %arg4[%c0_23, %c0_24, %c0_25] : memref<1x8x8xf32, #tpu.memory_space<vmem>>, vector<1x8x8xf32>
    %67 = vector.shape_cast %66 : vector<1x8x8xf32> to vector<8x8xf32>
    %68 = vector.shape_cast %65 : vector<8x8xf32> to vector<1x8x8xf32>
    tpu.vector_store %arg4[%c0_23, %c0_24, %c0_25], %68 {strides = array<i32>} : memref<1x8x8xf32, #tpu.memory_space<vmem>>, vector<1x8x8xf32>,
    %c0_26 = arith.constant 0 : index
    %c0_27 = arith.constant 0 : index
    %c0_28 = arith.constant 0 : index
    %69 = vector.load %arg5[%c0_26, %c0_27, %c0_28] : memref<1x8x8xf32, #tpu.memory_space<vmem>>, vector<1x8x8xf32>
    %70 = vector.shape_cast %69 : vector<1x8x8xf32> to vector<8x8xf32>
    %71 = arith.mulf %60, %60 : vector<256x8xf32>
    %cst_29 = arith.constant dense<0.000000e+00> : vector<8x8xf32>
    %72 = tpu.matmul %61, %71, %cst_29 {dimension_numbers = #tpu.dot_dimension_numbers<[1], [0], [0], [1], [0, 0, 1, 1], [], []>} : vector<8x256xf32>, vector<256x8xf32>, vector<8x8xf32> -> vector<8x8xf32>
    %73 = arith.addf %70, %72 : vector<8x8xf32>
    %c0_30 = arith.constant 0 : index
    %c0_31 = arith.constant 0 : index
    %c0_32 = arith.constant 0 : index
    %74 = vector.load %arg5[%c0_30, %c0_31, %c0_32] : memref<1x8x8xf32, #tpu.memory_space<vmem>>, vector<1x8x8xf32>
    %75 = vector.shape_cast %74 : vector<1x8x8xf32> to vector<8x8xf32>
    %76 = vector.shape_cast %73 : vector<8x8xf32> to vector<1x8x8xf32>
    tpu.vector_store %arg5[%c0_30, %c0_31, %c0_32], %76 {strides = array<i32>} : memref<1x8x8xf32, #tpu.memory_space<vmem>>, vector<1x8x8xf32>,
    return
  }
  func.func @transform_0(%arg0: i32, %arg1: i32) -> (i32, i32, i32, i32, i32) {
    %c0_i32 = arith.constant 0 : i32
    %c0_i32_0 = arith.constant 0 : i32
    %c0_i32_1 = arith.constant 0 : i32
    %c0_i32_2 = arith.constant 0 : i32
    return %arg0, %arg1, %c0_i32, %c0_i32_0, %c0_i32_1 : i32, i32, i32, i32, i32
  }
  func.func @transform_1(%arg0: i32, %arg1: i32) -> (i32, i32, i32, i32) {
    %c0_i32 = arith.constant 0 : i32
    %c0_i32_0 = arith.constant 0 : i32
    %c0_i32_1 = arith.constant 0 : i32
    %c0_i32_2 = arith.constant 0 : i32
    %c0_i32_3 = arith.constant 0 : i32
    return %c0_i32, %c0_i32_0, %c0_i32_1, %c0_i32_2 : i32, i32, i32, i32
  }
  func.func @transform_2(%arg0: i32, %arg1: i32) -> (i32, i32, i32) {
    %c0_i32 = arith.constant 0 : i32
    %c0_i32_0 = arith.constant 0 : i32
    %c0_i32_1 = arith.constant 0 : i32
    return %arg0, %c0_i32, %c0_i32_0 : i32, i32, i32
  }
  func.func @transform_3(%arg0: i32, %arg1: i32) -> (i32, i32, i32) {
    %c0_i32 = arith.constant 0 : i32
    %c0_i32_0 = arith.constant 0 : i32
    %c0_i32_1 = arith.constant 0 : i32
    return %arg0, %c0_i32, %c0_i32_0 : i32, i32, i32
  }
}

</mosaic_0001>

<llo_original>
// kernel: tpu_custom_call.1
$region0: #{tpu_custom_call.1}
  #allocation0 [shape = 'u32[]', space=smem, size = 0x4, offset = 0x4, fixed_abs, tag = 'smem constant byte address 0x4 - core index']
  #allocation1 [shape = 'u32[72,128]{1,0:T(1,128)}', space=vmem, size = 0x9000, scoped, tag = 'internal scratch']
  %s0 = inlined_call_operand.vmem [shape: f32[2,1,18,18,4], index: 0, kind: input, shape index: {}]
  %s1 = inlined_call_operand.vmem [shape: f32[3,3,4,8], index: 1, kind: input, shape index: {}]
  %s2 = inlined_call_operand.hbm [shape: f32[2,8,8], index: 2, kind: output, shape index: {0}]
  %s3 = inlined_call_operand.hbm [shape: f32[2,8,8], index: 3, kind: output, shape index: {1}]
  %4 = xla_tuple %s2, %s3
  %s5 = sld [smem:[#allocation0]]
  $region53: #{tpu_custom_call.1} parent=0
    _
  %s7 = ssub.s32 1, %s5
  %s8 = scalar_select 0, %s7, %s5
  $region1: #{tpu_custom_call.1} parent=0
    #allocation2 [shape = 'u8[8192]{0}', space=vmem, size = 0x2000, scoped, tag = 'output window, operand 0']
    #allocation3 [shape = 's32[2]{0}', space=sflag, size = 0x8, scoped, tag = 'scoped memory for tpu_custom_call.1']
    #allocation4 [shape = 'u8[8192]{0}', space=vmem, size = 0x2000, scoped, tag = 'output window, operand 1']
    #allocation5 [shape = 's32[2]{0}', space=sflag, size = 0x8, scoped, tag = 'scoped memory for tpu_custom_call.1']
    %9 = vsyncpa [#allocation3], 0
    %s10 = scalar_lea.sflag [#allocation3], 1
    %11 = vsyncpa %s10, 0
    %12 = vsyncpa [#allocation5], 0
    %s13 = scalar_lea.sflag [#allocation5], 1
    %14 = vsyncpa %s13, 0
    loop: start=0, step=1, limit=4
    $region2: #{tpu_custom_call.1} parent=1 // loop_pre_header
      _
    $region3: #{tpu_custom_call.1} parent=1 // loop_header
      %s16 = sphi 0, %s20
      %p17 = scmp.ge.s32.totalorder %s16, 4
      %s23 = sphi 0, %s35
      %s24 = sphi 0, %s31
      %s25 = sphi 0, %s23
      %s26 = sphi 0, %s24
      %s27 = sphi 0, %s25
      %s28 = sphi 0, %s26
      %s40 = sphi 0, %s42
      %s43 = sphi 0, %s40
      %s44 = sphi 0, %s43
      %s60 = sphi 0, %s44
      %s64 = sphi 0, %s64
      %s66 = sphi 0, %s64
      %s67 = sphi 0, %s66
      %s81 = sphi 0, %s67
      %s87 = sphi 0, %s89
      %s90 = sphi 0, %s87
      %s91 = sphi 0, %s90
      %s107 = sphi 0, %s91
      %s113 = sphi 0, %s115
      %s116 = sphi 0, %s113
      %s117 = sphi 0, %s116
      %s133 = sphi 0, %s117
    $region4: #{tpu_custom_call.1} parent=1 // loop_header_branch
      %19 = sbr.rel (%p17) target = $region8
    $region5: #{tpu_custom_call.1} parent=1 // loop_body
      %s21 = ssub.s32 %s16, 1
      %s22 = ssub.s32 %s16, 2
      %s29 = sadd.s32 1, %s24
      %p30 = scmp.ge.s32.totalorder %s29, 1
      %s31 = scalar_select %p30, 0, %s29
      %s32 = sadd.s32 1, %s23
      %s33 = scalar_select %p30, %s32, %s23
      %p34 = scmp.ge.s32.totalorder %s33, 2
      %s35 = scalar_select %p34, 0, %s33
      %s36 = ssub.s32 %s23, %s35
      %s37 = ssub.s32 %s24, %s31
      %s38 = sor.u32 %s36, %s37
      %p39 = scmp.eq.s32.totalorder %s38, 0
      %s41 = sadd.s32 %s40, 1
      %s42 = scalar_select %p39, %s40, %s41
      %p45 = pneg %p39
      %p46 = scmp.eq.s32.totalorder %s16, 1
      %p47 = por %p45, %p46
      %p48 = scmp.ne.s32.totalorder %s40, %s43
      %p49 = scmp.eq.s32.totalorder %s16, 0
      %p50 = por %p48, %p49
      %p51 = scmp.ne.s32.totalorder %s40, %s43
      %p52 = scmp.eq.s32.totalorder %s21, 1
      %p53 = por %p51, %p52
      %p54 = scmp.ne.s32.totalorder %s43, %s44
      %p55 = scmp.eq.s32.totalorder %s21, 0
      %p56 = por %p54, %p55
      %p57 = scmp.ne.s32.totalorder %s43, %s44
      %p58 = scmp.eq.s32.totalorder %s22, 1
      %p59 = por %p57, %p58
      %p61 = scmp.ne.s32.totalorder %s44, %s60
      %p62 = scmp.eq.s32.totalorder %s22, 0
      %p63 = por %p61, %p62
      %s65 = sadd.s32 %s64, 1
      %p68 = scmp.eq.s32.totalorder %s16, 1
      %p69 = scmp.ne.s32.totalorder %s64, %s66
      %p70 = scmp.eq.s32.totalorder %s16, 0
      %p71 = por %p69, %p70
      %p72 = scmp.ne.s32.totalorder %s64, %s66
      %p73 = scmp.eq.s32.totalorder %s21, 1
      %p74 = por %p72, %p73
      %p75 = scmp.ne.s32.totalorder %s66, %s67
      %p76 = scmp.eq.s32.totalorder %s21, 0
      %p77 = por %p75, %p76
      %p78 = scmp.ne.s32.totalorder %s66, %s67
      %p79 = scmp.eq.s32.totalorder %s22, 1
      %p80 = por %p78, %p79
      %p82 = scmp.ne.s32.totalorder %s67, %s81
      %p83 = scmp.eq.s32.totalorder %s22, 0
      %p84 = por %p82, %p83
      %s85 = ssub.s32 %s23, %s35
      %p86 = scmp.eq.s32.totalorder %s85, 0
      %s88 = sadd.s32 %s87, 1
      %s89 = scalar_select %p86, %s87, %s88
      %p92 = pneg %p86
      %p93 = scmp.eq.s32.totalorder %s16, 1
      %p94 = por %p92, %p93
      %p95 = scmp.ne.s32.totalorder %s87, %s90
      %p96 = scmp.eq.s32.totalorder %s16, 0
      %p97 = por %p95, %p96
      %p98 = scmp.ne.s32.totalorder %s87, %s90
      %p99 = scmp.eq.s32.totalorder %s21, 1
      %p100 = por %p98, %p99
      %p101 = scmp.ne.s32.totalorder %s90, %s91
      %p102 = scmp.eq.s32.totalorder %s21, 0
      %p103 = por %p101, %p102
      %p104 = scmp.ne.s32.totalorder %s90, %s91
      %p105 = scmp.eq.s32.totalorder %s22, 1
      %p106 = por %p104, %p105
      %p108 = scmp.ne.s32.totalorder %s91, %s107
      %p109 = scmp.eq.s32.totalorder %s22, 0
      %p110 = por %p108, %p109
      %s111 = ssub.s32 %s23, %s35
      %p112 = scmp.eq.s32.totalorder %s111, 0
      %s114 = sadd.s32 %s113, 1
      %s115 = scalar_select %p112, %s113, %s114
      %p118 = pneg %p112
      %p119 = scmp.eq.s32.totalorder %s16, 1
      %p120 = por %p118, %p119
      %p121 = scmp.ne.s32.totalorder %s113, %s116
      %p122 = scmp.eq.s32.totalorder %s16, 0
      %p123 = por %p121, %p122
      %p124 = scmp.ne.s32.totalorder %s113, %s116
      %p125 = scmp.eq.s32.totalorder %s21, 1
      %p126 = por %p124, %p125
      %p127 = scmp.ne.s32.totalorder %s116, %s117
      %p128 = scmp.eq.s32.totalorder %s21, 0
      %p129 = por %p127, %p128
      %p130 = scmp.ne.s32.totalorder %s116, %s117
      %p131 = scmp.eq.s32.totalorder %s22, 1
      %p132 = por %p130, %p131
      %p134 = scmp.ne.s32.totalorder %s117, %s133
      %p135 = scmp.eq.s32.totalorder %s22, 0
      %p136 = por %p134, %p135
      %p137 = scmp.le.s32.totalorder 1, %s16
      %p138 = scmp.lt.s32.totalorder %s16, 3
      %p139 = pnand %p137, %p138
      %p140 = pneg %p139
      // Predicated region
      $region9: #{tpu_custom_call.1} parent=5 // pred_check
        _
      $region10: #{tpu_custom_call.1} parent=5 // pred_check_branch
        %142 = sbr.rel (%p139) target = $region12
      $region11: #{tpu_custom_call.1} parent=5 // pred_region
        %s143 = ssub.s32 %s16, 1
        // Predicated region
        $region13: #{tpu_custom_call.1} parent=11 // pred_check
          %p144 = pneg %p77
        $region14: #{tpu_custom_call.1} parent=11 // pred_check_branch
          %146 = sbr.rel (%p144) target = $region16
        $region15: #{tpu_custom_call.1} parent=11 // pred_region
          _
        $region16: #{tpu_custom_call.1} parent=11 // pred_fallthru
          _
      $region12: #{tpu_custom_call.1} parent=5 // pred_fallthru
        _
      %p147 = scmp.lt.s32.totalorder %s16, 2
      // Predicated region
      $region17: #{tpu_custom_call.1} parent=5 // pred_check
        %p148 = pneg %p147
      $region18: #{tpu_custom_call.1} parent=5 // pred_check_branch
        %150 = sbr.rel (%p148) target = $region20
      $region19: #{tpu_custom_call.1} parent=5 // pred_region
        // Predicated region
        $region21: #{tpu_custom_call.1} parent=19 // pred_check
          %p151 = pneg %p50
        $region22: #{tpu_custom_call.1} parent=19 // pred_check_branch
          %153 = sbr.rel (%p151) target = $region24
        $region23: #{tpu_custom_call.1} parent=19 // pred_region
          %p154 = scmp.lt.s32.totalorder %s23, 1
          %s155 = scalar_select %p154, %s23, 1
          %p156 = scmp.lt.s32.totalorder %s24, 0
          %s157 = scalar_select %p156, %s24, 0
          %s158 = smul.addr %s157, 54
          %s159 = smul.addr %s155, 54
          %s160 = sadd.s32 %s158, %s159
          %s161 = smul.addr %s160, 8
          %s162 = scalar_lea.vmem %s0, %s161
        $region24: #{tpu_custom_call.1} parent=19 // pred_fallthru
          _
      $region20: #{tpu_custom_call.1} parent=5 // pred_fallthru
        _
      %p163 = scmp.le.s32.totalorder 1, %s16
      %p164 = scmp.lt.s32.totalorder %s16, 3
      %p165 = pnand %p163, %p164
      %p166 = pneg %p165
      // Predicated region
      $region25: #{tpu_custom_call.1} parent=5 // pred_check
        _
      $region26: #{tpu_custom_call.1} parent=5 // pred_check_branch
        %168 = sbr.rel (%p165) target = $region28
      $region27: #{tpu_custom_call.1} parent=5 // pred_region
        %s169 = ssub.s32 %s16, 1
        %p170 = scmp.lt.s32.totalorder %s25, 1
        %s171 = scalar_select %p170, %s25, 1
        %p172 = scmp.lt.s32.totalorder %s26, 0
        %s173 = scalar_select %p172, %s26, 0
        %s174 = smul.addr %s173, 54
        %s175 = smul.addr %s171, 54
        %s176 = sadd.s32 %s174, %s175
        %s177 = smul.addr %s176, 8
        %s178 = scalar_lea.vmem %s0, %s177
        %p179 = pneg %p56
        %p180 = pneg %p53
        %p181 = pneg %p77
        %p182 = pneg %p74
        %p183 = pneg %p103
        %p184 = pneg %p100
        %s185 = sand.u32 %s90, 1
        %s186 = scalar_lea.sflag [#allocation3], %s185
        %s187 = sand.u32 %s90, 1
        %s188 = smul.addr %s187, 8
        %s189 = scalar_lea.vmem [#allocation2], %s188
        %p190 = pneg %p129
        %p191 = pneg %p126
        %s192 = sand.u32 %s116, 1
        %s193 = scalar_lea.sflag [#allocation5], %s192
        %s194 = sand.u32 %s116, 1
        %s195 = smul.addr %s194, 8
        %s196 = scalar_lea.vmem [#allocation4], %s195
        %p197 = scmp.lt.s32.totalorder %s25, 1
        %s198 = scalar_select %p197, %s25, 1
        %p199 = scmp.lt.s32.totalorder %s26, 0
        %s200 = scalar_select %p199, %s26, 0
        %s201 = smul.addr %s200, 54
        %s202 = smul.addr %s198, 54
        %s203 = sadd.s32 %s201, %s202
        %s204 = smul.addr %s203, 8
        %s205 = scalar_lea.vmem %s0, %s204
        %p206 = scmp.eq.s32.totalorder %s26, 0
        // Predicated region
        $region29: #{tpu_custom_call.1} parent=27 // pred_check
          %p207 = pneg %p206
        $region30: #{tpu_custom_call.1} parent=27 // pred_check_branch
          %209 = sbr.rel (%p207) target = $region32
        $region31: #{tpu_custom_call.1} parent=27 // pred_region
          %vm210 = vcmask 64512
          %211 = vst.msk [vmem:[%s189] sm:$0xff] %vm210, 0.0
          %212 = vst.msk [vmem:[%s196] sm:$0xff] %vm210, 0.0
        $region32: #{tpu_custom_call.1} parent=27 // pred_fallthru
          _
        %v213 = vld [vmem:[%s205] sm:$0xff]
        %v214 = vld [vmem:[%s205 + $0x8] sm:$0xff]
        %v215 = vld [vmem:[%s205 + $0x10] sm:$0x3]
        %v216 = vld [vmem:[%s205 + $0x18] sm:$0xff]
        %v217 = vld [vmem:[%s205 + $0x20] sm:$0xff]
        %v218 = vld [vmem:[%s205 + $0x28] sm:$0x3]
        %v219 = vld [vmem:[%s205 + $0x30] sm:$0xff]
        %v220 = vld [vmem:[%s205 + $0x38] sm:$0xff]
        %v221 = vld [vmem:[%s205 + $0x40] sm:$0x3]
        %v222 = vld [vmem:[%s205 + $0x48] sm:$0xff]
        %v223 = vld [vmem:[%s205 + $0x50] sm:$0xff]
        %v224 = vld [vmem:[%s205 + $0x58] sm:$0x3]
        %v225 = vld [vmem:[%s205 + $0x60] sm:$0xff]
        %v226 = vld [vmem:[%s205 + $0x68] sm:$0xff]
        %v227 = vld [vmem:[%s205 + $0x70] sm:$0x3]
        %v228 = vld [vmem:[%s205 + $0x78] sm:$0xff]
        %v229 = vld [vmem:[%s205 + $0x80] sm:$0xff]
        %v230 = vld [vmem:[%s205 + $0x88] sm:$0x3]
        %v231 = vld [vmem:[%s205 + $0x90] sm:$0xff]
        %v232 = vld [vmem:[%s205 + $0x98] sm:$0xff]
        %v233 = vld [vmem:[%s205 + $0xa0] sm:$0x3]
        %v234 = vld [vmem:[%s205 + $0xa8] sm:$0xff]
        %v235 = vld [vmem:[%s205 + $0xb0] sm:$0xff]
        %v236 = vld [vmem:[%s205 + $0xb8] sm:$0x3]
        %v237 = vld [vmem:[%s205 + $0xc0] sm:$0xff]
        %v238 = vld [vmem:[%s205 + $0xc8] sm:$0xff]
        %v239 = vld [vmem:[%s205 + $0xd0] sm:$0x3]
        %v240 = vld [vmem:[%s205 + $0xd8] sm:$0xff]
        %v241 = vld [vmem:[%s205 + $0xe0] sm:$0xff]
        %v242 = vld [vmem:[%s205 + $0xe8] sm:$0x3]
        %v243 = vld [vmem:[%s205 + $0xf0] sm:$0xff]
        %v244 = vld [vmem:[%s205 + $0xf8] sm:$0xff]
        %v245 = vld [vmem:[%s205 + $0x100] sm:$0x3]
        %v246 = vld [vmem:[%s205 + $0x108] sm:$0xff]
        %v247 = vld [vmem:[%s205 + $0x110] sm:$0xff]
        %v248 = vld [vmem:[%s205 + $0x118] sm:$0x3]
        %v249 = vld [vmem:[%s205 + $0x120] sm:$0xff]
        %v250 = vld [vmem:[%s205 + $0x128] sm:$0xff]
        %v251 = vld [vmem:[%s205 + $0x130] sm:$0x3]
        %v252 = vld [vmem:[%s205 + $0x138] sm:$0xff]
        %v253 = vld [vmem:[%s205 + $0x140] sm:$0xff]
        %v254 = vld [vmem:[%s205 + $0x148] sm:$0x3]
        %v255 = vld [vmem:[%s205 + $0x150] sm:$0xff]
        %v256 = vld [vmem:[%s205 + $0x158] sm:$0xff]
        %v257 = vld [vmem:[%s205 + $0x160] sm:$0x3]
        %v258 = vld [vmem:[%s205 + $0x168] sm:$0xff]
        %v259 = vld [vmem:[%s205 + $0x170] sm:$0xff]
        %v260 = vld [vmem:[%s205 + $0x178] sm:$0x3]
        %v261 = vld [vmem:[%s205 + $0x180] sm:$0xff]
        %v262 = vld [vmem:[%s205 + $0x188] sm:$0xff]
        %v263 = vld [vmem:[%s205 + $0x190] sm:$0x3]
        %v264 = vld [vmem:[%s205 + $0x198] sm:$0xff]
        %v265 = vld [vmem:[%s205 + $0x1a0] sm:$0xff]
        %v266 = vld [vmem:[%s205 + $0x1a8] sm:$0x3]
        %v267 = vld [vmem:[%s1] sm:$0xf]
        %v268 = vld [vmem:[%s1 + $0x4] sm:$0xf]
        %v269 = vld [vmem:[%s1 + $0x8] sm:$0xf]
        %v270 = vld [vmem:[%s1 + $0xc] sm:$0xf]
        %v271 = vld [vmem:[%s1 + $0x10] sm:$0xf]
        %v272 = vld [vmem:[%s1 + $0x14] sm:$0xf]
        %v273 = vld [vmem:[%s1 + $0x18] sm:$0xf]
        %v274 = vld [vmem:[%s1 + $0x1c] sm:$0xf]
        %v275 = vld [vmem:[%s1 + $0x20] sm:$0xf]
        %vm324 = vcmask 1046528
        %v325 = vrot.slane %v213, 1
        %v326 = vrot.slane %v214, 1
        %v327 = vsel %vm324, %v325, %v326
        %v328 = vrot.slane %v215, 1
        %v329 = vsel %vm324, %v326, %v328
        %v330 = vrot.slane %v216, 1
        %v331 = vrot.slane %v217, 1
        %v332 = vsel %vm324, %v330, %v331
        %v333 = vrot.slane %v218, 1
        %v334 = vsel %vm324, %v331, %v333
        %v335 = vrot.slane %v219, 1
        %v336 = vrot.slane %v220, 1
        %v337 = vsel %vm324, %v335, %v336
        %v338 = vrot.slane %v221, 1
        %v339 = vsel %vm324, %v336, %v338
        %v340 = vrot.slane %v222, 1
        %v341 = vrot.slane %v223, 1
        %v342 = vsel %vm324, %v340, %v341
        %v343 = vrot.slane %v224, 1
        %v344 = vsel %vm324, %v341, %v343
        %v345 = vrot.slane %v225, 1
        %v346 = vrot.slane %v226, 1
        %v347 = vsel %vm324, %v345, %v346
        %v348 = vrot.slane %v227, 1
        %v349 = vsel %vm324, %v346, %v348
        %v350 = vrot.slane %v228, 1
        %v351 = vrot.slane %v229, 1
        %v352 = vsel %vm324, %v350, %v351
        %v353 = vrot.slane %v230, 1
        %v354 = vsel %vm324, %v351, %v353
        %v355 = vrot.slane %v231, 1
        %v356 = vrot.slane %v232, 1
        %v357 = vsel %vm324, %v355, %v356
        %v358 = vrot.slane %v233, 1
        %v359 = vsel %vm324, %v356, %v358
        %v360 = vrot.slane %v234, 1
        %v361 = vrot.slane %v235, 1
        %v362 = vsel %vm324, %v360, %v361
        %v363 = vrot.slane %v236, 1
        %v364 = vsel %vm324, %v361, %v363
        %v365 = vrot.slane %v237, 1
        %v366 = vrot.slane %v238, 1
        %v367 = vsel %vm324, %v365, %v366
        %v368 = vrot.slane %v239, 1
        %v369 = vsel %vm324, %v366, %v368
        %v370 = vrot.slane %v240, 1
        %v371 = vrot.slane %v241, 1
        %v372 = vsel %vm324, %v370, %v371
        %v373 = vrot.slane %v242, 1
        %v374 = vsel %vm324, %v371, %v373
        %v375 = vrot.slane %v243, 1
        %v376 = vrot.slane %v244, 1
        %v377 = vsel %vm324, %v375, %v376
        %v378 = vrot.slane %v245, 1
        %v379 = vsel %vm324, %v376, %v378
        %v380 = vrot.slane %v246, 1
        %v381 = vrot.slane %v247, 1
        %v382 = vsel %vm324, %v380, %v381
        %v383 = vrot.slane %v248, 1
        %v384 = vsel %vm324, %v381, %v383
        %v385 = vrot.slane %v249, 1
        %v386 = vrot.slane %v250, 1
        %v387 = vsel %vm324, %v385, %v386
        %v388 = vrot.slane %v251, 1
        %v389 = vsel %vm324, %v386, %v388
        %v390 = vrot.slane %v252, 1
        %v391 = vrot.slane %v253, 1
        %v392 = vsel %vm324, %v390, %v391
        %v393 = vrot.slane %v254, 1
        %v394 = vsel %vm324, %v391, %v393
        %v395 = vrot.slane %v255, 1
        %v396 = vrot.slane %v256, 1
        %v397 = vsel %vm324, %v395, %v396
        %v398 = vrot.slane %v257, 1
        %v399 = vsel %vm324, %v396, %v398
        %v400 = vrot.slane %v258, 1
        %v401 = vrot.slane %v259, 1
        %v402 = vsel %vm324, %v400, %v401
        %v403 = vrot.slane %v260, 1
        %v404 = vsel %vm324, %v401, %v403
        %vm405 = vcmask 31744
        %v406 = vsel %vm405, %v327, 0
        %v408 = vsel %vm405, %v329, 0
        %v410 = vsel %vm405, %v332, 0
        %v412 = vsel %vm405, %v334, 0
        %v414 = vsel %vm405, %v337, 0
        %v416 = vsel %vm405, %v339, 0
        %v418 = vsel %vm405, %v342, 0
        %v420 = vsel %vm405, %v344, 0
        %v422 = vsel %vm405, %v347, 0
        %v424 = vsel %vm405, %v349, 0
        %v426 = vsel %vm405, %v352, 0
        %v428 = vsel %vm405, %v354, 0
        %v430 = vsel %vm405, %v357, 0
        %v432 = vsel %vm405, %v359, 0
        %v434 = vsel %vm405, %v362, 0
        %v436 = vsel %vm405, %v364, 0
        %v438 = vsel %vm405, %v367, 0
        %v440 = vsel %vm405, %v369, 0
        %v442 = vsel %vm405, %v372, 0
        %v444 = vsel %vm405, %v374, 0
        %v446 = vsel %vm405, %v377, 0
        %v448 = vsel %vm405, %v379, 0
        %v450 = vsel %vm405, %v382, 0
        %v452 = vsel %vm405, %v384, 0
        %v454 = vsel %vm405, %v387, 0
        %v456 = vsel %vm405, %v389, 0
        %v458 = vsel %vm405, %v392, 0
        %v460 = vsel %vm405, %v394, 0
        %v462 = vsel %vm405, %v397, 0
        %v464 = vsel %vm405, %v399, 0
        %v466 = vsel %vm405, %v402, 0
        %v468 = vsel %vm405, %v404, 0
        %vm470 = vcmask 1043456
        %v472 = vsel %vm470, %v268, 0
        %474 = vmatpush.msra.mxu0 0.0
        %475 = vmatpush.msra.mxu0 0.0
        %476 = vmatpush.msra.mxu0 0.0
        %477 = vmatpush.msra.mxu0 0.0
        %478 = vmatpush.msra.mxu0 0.0
        %479 = vmatpush.msra.mxu0 0.0
        %480 = vmatpush.msra.mxu0 0.0
        %481 = vmatpush.msra.mxu0 0.0
        %482 = vmatpush.msra.mxu0 0.0
        %483 = vmatpush.msra.mxu0 0.0
        %484 = vmatpush.msra.mxu0 0.0
        %485 = vmatpush.msra.mxu0 0.0
        %486 = vmatpush.msra.mxu0 0.0
        %487 = vmatpush.msra.mxu0 0.0
        %488 = vmatpush.msra.mxu0 0.0
        %489 = vmatpush.msra.mxu0 %v472
        %490 = vmatmul.f32.gmra.mxu0 %v406
        %v491 = vpop.f32.mrf.mxu0
        %v492 = vadd.f32 0.0, %v491
        %493 = vmatmul.f32.gmra.mxu0 %v408
        %v494 = vpop.f32.mrf.mxu0
        %v495 = vadd.f32 0.0, %v494
        %496 = vmatmul.f32.gmra.mxu0 %v410
        %v497 = vpop.f32.mrf.mxu0
        %v498 = vadd.f32 0.0, %v497
        %499 = vmatmul.f32.gmra.mxu0 %v412
        %v500 = vpop.f32.mrf.mxu0
        %v501 = vadd.f32 0.0, %v500
        %502 = vmatmul.f32.gmra.mxu0 %v414
        %v503 = vpop.f32.mrf.mxu0
        %v504 = vadd.f32 0.0, %v503
        %505 = vmatmul.f32.gmra.mxu0 %v416
        %v506 = vpop.f32.mrf.mxu0
        %v507 = vadd.f32 0.0, %v506
        %508 = vmatmul.f32.gmra.mxu0 %v418
        %v509 = vpop.f32.mrf.mxu0
        %v510 = vadd.f32 0.0, %v509
        %511 = vmatmul.f32.gmra.mxu0 %v420
        %v512 = vpop.f32.mrf.mxu0
        %v513 = vadd.f32 0.0, %v512
        %514 = vmatmul.f32.gmra.mxu0 %v422
        %v515 = vpop.f32.mrf.mxu0
        %v516 = vadd.f32 0.0, %v515
        %517 = vmatmul.f32.gmra.mxu0 %v424
        %v518 = vpop.f32.mrf.mxu0
        %v519 = vadd.f32 0.0, %v518
        %520 = vmatmul.f32.gmra.mxu0 %v426
        %v521 = vpop.f32.mrf.mxu0
        %v522 = vadd.f32 0.0, %v521
        %523 = vmatmul.f32.gmra.mxu0 %v428
        %v524 = vpop.f32.mrf.mxu0
        %v525 = vadd.f32 0.0, %v524
        %526 = vmatmul.f32.gmra.mxu0 %v430
        %v527 = vpop.f32.mrf.mxu0
        %v528 = vadd.f32 0.0, %v527
        %529 = vmatmul.f32.gmra.mxu0 %v432
        %v530 = vpop.f32.mrf.mxu0
        %v531 = vadd.f32 0.0, %v530
        %532 = vmatmul.f32.gmra.mxu0 %v434
        %v533 = vpop.f32.mrf.mxu0
        %v534 = vadd.f32 0.0, %v533
        %535 = vmatmul.f32.gmra.mxu0 %v436
        %v536 = vpop.f32.mrf.mxu0
        %v537 = vadd.f32 0.0, %v536
        %538 = vmatmul.f32.gmra.mxu0 %v438
        %v539 = vpop.f32.mrf.mxu0
        %v540 = vadd.f32 0.0, %v539
        %541 = vmatmul.f32.gmra.mxu0 %v440
        %v542 = vpop.f32.mrf.mxu0
        %v543 = vadd.f32 0.0, %v542
        %544 = vmatmul.f32.gmra.mxu0 %v442
        %v545 = vpop.f32.mrf.mxu0
        %v546 = vadd.f32 0.0, %v545
        %547 = vmatmul.f32.gmra.mxu0 %v444
        %v548 = vpop.f32.mrf.mxu0
        %v549 = vadd.f32 0.0, %v548
        %550 = vmatmul.f32.gmra.mxu0 %v446
        %v551 = vpop.f32.mrf.mxu0
        %v552 = vadd.f32 0.0, %v551
        %553 = vmatmul.f32.gmra.mxu0 %v448
        %v554 = vpop.f32.mrf.mxu0
        %v555 = vadd.f32 0.0, %v554
        %556 = vmatmul.f32.gmra.mxu0 %v450
        %v557 = vpop.f32.mrf.mxu0
        %v558 = vadd.f32 0.0, %v557
        %559 = vmatmul.f32.gmra.mxu0 %v452
        %v560 = vpop.f32.mrf.mxu0
        %v561 = vadd.f32 0.0, %v560
        %562 = vmatmul.f32.gmra.mxu0 %v454
        %v563 = vpop.f32.mrf.mxu0
        %v564 = vadd.f32 0.0, %v563
        %565 = vmatmul.f32.gmra.mxu0 %v456
        %v566 = vpop.f32.mrf.mxu0
        %v567 = vadd.f32 0.0, %v566
        %568 = vmatmul.f32.gmra.mxu0 %v458
        %v569 = vpop.f32.mrf.mxu0
        %v570 = vadd.f32 0.0, %v569
        %571 = vmatmul.f32.gmra.mxu0 %v460
        %v572 = vpop.f32.mrf.mxu0
        %v573 = vadd.f32 0.0, %v572
        %574 = vmatmul.f32.gmra.mxu0 %v462
        %v575 = vpop.f32.mrf.mxu0
        %v576 = vadd.f32 0.0, %v575
        %577 = vmatmul.f32.gmra.mxu0 %v464
        %v578 = vpop.f32.mrf.mxu0
        %v579 = vadd.f32 0.0, %v578
        %580 = vmatmul.f32.gmra.mxu0 %v466
        %v581 = vpop.f32.mrf.mxu0
        %v582 = vadd.f32 0.0, %v581
        %583 = vmatmul.f32.gmra.mxu0 %v468
        %v584 = vpop.f32.mrf.mxu0
        %v585 = vadd.f32 0.0, %v584
        %586 = vdwg.mxu0
        %v587 = vsel %vm405, %v213, 0
        %v589 = vsel %vm405, %v214, 0
        %v591 = vsel %vm405, %v216, 0
        %v593 = vsel %vm405, %v217, 0
        %v595 = vsel %vm405, %v219, 0
        %v597 = vsel %vm405, %v220, 0
        %v599 = vsel %vm405, %v222, 0
        %v601 = vsel %vm405, %v223, 0
        %v603 = vsel %vm405, %v225, 0
        %v605 = vsel %vm405, %v226, 0
        %v607 = vsel %vm405, %v228, 0
        %v609 = vsel %vm405, %v229, 0
        %v611 = vsel %vm405, %v231, 0
        %v613 = vsel %vm405, %v232, 0
        %v615 = vsel %vm405, %v234, 0
        %v617 = vsel %vm405, %v235, 0
        %v619 = vsel %vm405, %v237, 0
        %v621 = vsel %vm405, %v238, 0
        %v623 = vsel %vm405, %v240, 0
        %v625 = vsel %vm405, %v241, 0
        %v627 = vsel %vm405, %v243, 0
        %v629 = vsel %vm405, %v244, 0
        %v631 = vsel %vm405, %v246, 0
        %v633 = vsel %vm405, %v247, 0
        %v635 = vsel %vm405, %v249, 0
        %v637 = vsel %vm405, %v250, 0
        %v639 = vsel %vm405, %v252, 0
        %v641 = vsel %vm405, %v253, 0
        %v643 = vsel %vm405, %v255, 0
        %v645 = vsel %vm405, %v256, 0
        %v647 = vsel %vm405, %v258, 0
        %v649 = vsel %vm405, %v259, 0
        %v652 = vsel %vm470, %v267, 0
        %654 = vmatpush.msra.mxu0 0.0
        %655 = vmatpush.msra.mxu0 0.0
        %656 = vmatpush.msra.mxu0 0.0
        %657 = vmatpush.msra.mxu0 0.0
        %658 = vmatpush.msra.mxu0 0.0
        %659 = vmatpush.msra.mxu0 0.0
        %660 = vmatpush.msra.mxu0 0.0
        %661 = vmatpush.msra.mxu0 0.0
        %662 = vmatpush.msra.mxu0 0.0
        %663 = vmatpush.msra.mxu0 0.0
        %664 = vmatpush.msra.mxu0 0.0
        %665 = vmatpush.msra.mxu0 0.0
        %666 = vmatpush.msra.mxu0 0.0
        %667 = vmatpush.msra.mxu0 0.0
        %668 = vmatpush.msra.mxu0 0.0
        %669 = vmatpush.msra.mxu0 %v652
        %670 = vmatmul.f32.gmra.mxu0 %v587
        %v671 = vpop.f32.mrf.mxu0
        %v672 = vadd.f32 %v492, %v671
        %673 = vmatmul.f32.gmra.mxu0 %v589
        %v674 = vpop.f32.mrf.mxu0
        %v675 = vadd.f32 %v495, %v674
        %676 = vmatmul.f32.gmra.mxu0 %v591
        %v677 = vpop.f32.mrf.mxu0
        %v678 = vadd.f32 %v498, %v677
        %679 = vmatmul.f32.gmra.mxu0 %v593
        %v680 = vpop.f32.mrf.mxu0
        %v681 = vadd.f32 %v501, %v680
        %682 = vmatmul.f32.gmra.mxu0 %v595
        %v683 = vpop.f32.mrf.mxu0
        %v684 = vadd.f32 %v504, %v683
        %685 = vmatmul.f32.gmra.mxu0 %v597
        %v686 = vpop.f32.mrf.mxu0
        %v687 = vadd.f32 %v507, %v686
        %688 = vmatmul.f32.gmra.mxu0 %v599
        %v689 = vpop.f32.mrf.mxu0
        %v690 = vadd.f32 %v510, %v689
        %691 = vmatmul.f32.gmra.mxu0 %v601
        %v692 = vpop.f32.mrf.mxu0
        %v693 = vadd.f32 %v513, %v692
        %694 = vmatmul.f32.gmra.mxu0 %v603
        %v695 = vpop.f32.mrf.mxu0
        %v696 = vadd.f32 %v516, %v695
        %697 = vmatmul.f32.gmra.mxu0 %v605
        %v698 = vpop.f32.mrf.mxu0
        %v699 = vadd.f32 %v519, %v698
        %700 = vmatmul.f32.gmra.mxu0 %v607
        %v701 = vpop.f32.mrf.mxu0
        %v702 = vadd.f32 %v522, %v701
        %703 = vmatmul.f32.gmra.mxu0 %v609
        %v704 = vpop.f32.mrf.mxu0
        %v705 = vadd.f32 %v525, %v704
        %706 = vmatmul.f32.gmra.mxu0 %v611
        %v707 = vpop.f32.mrf.mxu0
        %v708 = vadd.f32 %v528, %v707
        %709 = vmatmul.f32.gmra.mxu0 %v613
        %v710 = vpop.f32.mrf.mxu0
        %v711 = vadd.f32 %v531, %v710
        %712 = vmatmul.f32.gmra.mxu0 %v615
        %v713 = vpop.f32.mrf.mxu0
        %v714 = vadd.f32 %v534, %v713
        %715 = vmatmul.f32.gmra.mxu0 %v617
        %v716 = vpop.f32.mrf.mxu0
        %v717 = vadd.f32 %v537, %v716
        %718 = vmatmul.f32.gmra.mxu0 %v619
        %v719 = vpop.f32.mrf.mxu0
        %v720 = vadd.f32 %v540, %v719
        %721 = vmatmul.f32.gmra.mxu0 %v621
        %v722 = vpop.f32.mrf.mxu0
        %v723 = vadd.f32 %v543, %v722
        %724 = vmatmul.f32.gmra.mxu0 %v623
        %v725 = vpop.f32.mrf.mxu0
        %v726 = vadd.f32 %v546, %v725
        %727 = vmatmul.f32.gmra.mxu0 %v625
        %v728 = vpop.f32.mrf.mxu0
        %v729 = vadd.f32 %v549, %v728
        %730 = vmatmul.f32.gmra.mxu0 %v627
        %v731 = vpop.f32.mrf.mxu0
        %v732 = vadd.f32 %v552, %v731
        %733 = vmatmul.f32.gmra.mxu0 %v629
        %v734 = vpop.f32.mrf.mxu0
        %v735 = vadd.f32 %v555, %v734
        %736 = vmatmul.f32.gmra.mxu0 %v631
        %v737 = vpop.f32.mrf.mxu0
        %v738 = vadd.f32 %v558, %v737
        %739 = vmatmul.f32.gmra.mxu0 %v633
        %v740 = vpop.f32.mrf.mxu0
        %v741 = vadd.f32 %v561, %v740
        %742 = vmatmul.f32.gmra.mxu0 %v635
        %v743 = vpop.f32.mrf.mxu0
        %v744 = vadd.f32 %v564, %v743
        %745 = vmatmul.f32.gmra.mxu0 %v637
        %v746 = vpop.f32.mrf.mxu0
        %v747 = vadd.f32 %v567, %v746
        %748 = vmatmul.f32.gmra.mxu0 %v639
        %v749 = vpop.f32.mrf.mxu0
        %v750 = vadd.f32 %v570, %v749
        %751 = vmatmul.f32.gmra.mxu0 %v641
        %v752 = vpop.f32.mrf.mxu0
        %v753 = vadd.f32 %v573, %v752
        %754 = vmatmul.f32.gmra.mxu0 %v643
        %v755 = vpop.f32.mrf.mxu0
        %v756 = vadd.f32 %v576, %v755
        %757 = vmatmul.f32.gmra.mxu0 %v645
        %v758 = vpop.f32.mrf.mxu0
        %v759 = vadd.f32 %v579, %v758
        %760 = vmatmul.f32.gmra.mxu0 %v647
        %v761 = vpop.f32.mrf.mxu0
        %v762 = vadd.f32 %v582, %v761
        %763 = vmatmul.f32.gmra.mxu0 %v649
        %v764 = vpop.f32.mrf.mxu0
        %v765 = vadd.f32 %v585, %v764
        %766 = vdwg.mxu0
        %vm767 = vcmask 1045504
        %v768 = vrot.slane %v213, 2
        %v769 = vrot.slane %v214, 2
        %v770 = vsel %vm767, %v768, %v769
        %v771 = vrot.slane %v215, 2
        %v772 = vsel %vm767, %v769, %v771
        %v773 = vrot.slane %v216, 2
        %v774 = vrot.slane %v217, 2
        %v775 = vsel %vm767, %v773, %v774
        %v776 = vrot.slane %v218, 2
        %v777 = vsel %vm767, %v774, %v776
        %v778 = vrot.slane %v219, 2
        %v779 = vrot.slane %v220, 2
        %v780 = vsel %vm767, %v778, %v779
        %v781 = vrot.slane %v221, 2
        %v782 = vsel %vm767, %v779, %v781
        %v783 = vrot.slane %v222, 2
        %v784 = vrot.slane %v223, 2
        %v785 = vsel %vm767, %v783, %v784
        %v786 = vrot.slane %v224, 2
        %v787 = vsel %vm767, %v784, %v786
        %v788 = vrot.slane %v225, 2
        %v789 = vrot.slane %v226, 2
        %v790 = vsel %vm767, %v788, %v789
        %v791 = vrot.slane %v227, 2
        %v792 = vsel %vm767, %v789, %v791
        %v793 = vrot.slane %v228, 2
        %v794 = vrot.slane %v229, 2
        %v795 = vsel %vm767, %v793, %v794
        %v796 = vrot.slane %v230, 2
        %v797 = vsel %vm767, %v794, %v796
        %v798 = vrot.slane %v231, 2
        %v799 = vrot.slane %v232, 2
        %v800 = vsel %vm767, %v798, %v799
        %v801 = vrot.slane %v233, 2
        %v802 = vsel %vm767, %v799, %v801
        %v803 = vrot.slane %v234, 2
        %v804 = vrot.slane %v235, 2
        %v805 = vsel %vm767, %v803, %v804
        %v806 = vrot.slane %v236, 2
        %v807 = vsel %vm767, %v804, %v806
        %v808 = vrot.slane %v237, 2
        %v809 = vrot.slane %v238, 2
        %v810 = vsel %vm767, %v808, %v809
        %v811 = vrot.slane %v239, 2
        %v812 = vsel %vm767, %v809, %v811
        %v813 = vrot.slane %v240, 2
        %v814 = vrot.slane %v241, 2
        %v815 = vsel %vm767, %v813, %v814
        %v816 = vrot.slane %v242, 2
        %v817 = vsel %vm767, %v814, %v816
        %v818 = vrot.slane %v243, 2
        %v819 = vrot.slane %v244, 2
        %v820 = vsel %vm767, %v818, %v819
        %v821 = vrot.slane %v245, 2
        %v822 = vsel %vm767, %v819, %v821
        %v823 = vrot.slane %v246, 2
        %v824 = vrot.slane %v247, 2
        %v825 = vsel %vm767, %v823, %v824
        %v826 = vrot.slane %v248, 2
        %v827 = vsel %vm767, %v824, %v826
        %v828 = vrot.slane %v249, 2
        %v829 = vrot.slane %v250, 2
        %v830 = vsel %vm767, %v828, %v829
        %v831 = vrot.slane %v251, 2
        %v832 = vsel %vm767, %v829, %v831
        %v833 = vrot.slane %v252, 2
        %v834 = vrot.slane %v253, 2
        %v835 = vsel %vm767, %v833, %v834
        %v836 = vrot.slane %v254, 2
        %v837 = vsel %vm767, %v834, %v836
        %v838 = vrot.slane %v255, 2
        %v839 = vrot.slane %v256, 2
        %v840 = vsel %vm767, %v838, %v839
        %v841 = vrot.slane %v257, 2
        %v842 = vsel %vm767, %v839, %v841
        %v843 = vrot.slane %v258, 2
        %v844 = vrot.slane %v259, 2
        %v845 = vsel %vm767, %v843, %v844
        %v846 = vrot.slane %v260, 2
        %v847 = vsel %vm767, %v844, %v846
        %v848 = vsel %vm405, %v770, 0
        %v850 = vsel %vm405, %v772, 0
        %v852 = vsel %vm405, %v775, 0
        %v854 = vsel %vm405, %v777, 0
        %v856 = vsel %vm405, %v780, 0
        %v858 = vsel %vm405, %v782, 0
        %v860 = vsel %vm405, %v785, 0
        %v862 = vsel %vm405, %v787, 0
        %v864 = vsel %vm405, %v790, 0
        %v866 = vsel %vm405, %v792, 0
        %v868 = vsel %vm405, %v795, 0
        %v870 = vsel %vm405, %v797, 0
        %v872 = vsel %vm405, %v800, 0
        %v874 = vsel %vm405, %v802, 0
        %v876 = vsel %vm405, %v805, 0
        %v878 = vsel %vm405, %v807, 0
        %v880 = vsel %vm405, %v810, 0
        %v882 = vsel %vm405, %v812, 0
        %v884 = vsel %vm405, %v815, 0
        %v886 = vsel %vm405, %v817, 0
        %v888 = vsel %vm405, %v820, 0
        %v890 = vsel %vm405, %v822, 0
        %v892 = vsel %vm405, %v825, 0
        %v894 = vsel %vm405, %v827, 0
        %v896 = vsel %vm405, %v830, 0
        %v898 = vsel %vm405, %v832, 0
        %v900 = vsel %vm405, %v835, 0
        %v902 = vsel %vm405, %v837, 0
        %v904 = vsel %vm405, %v840, 0
        %v906 = vsel %vm405, %v842, 0
        %v908 = vsel %vm405, %v845, 0
        %v910 = vsel %vm405, %v847, 0
        %v913 = vsel %vm470, %v269, 0
        %915 = vmatpush.msra.mxu0 0.0
        %916 = vmatpush.msra.mxu0 0.0
        %917 = vmatpush.msra.mxu0 0.0
        %918 = vmatpush.msra.mxu0 0.0
        %919 = vmatpush.msra.mxu0 0.0
        %920 = vmatpush.msra.mxu0 0.0
        %921 = vmatpush.msra.mxu0 0.0
        %922 = vmatpush.msra.mxu0 0.0
        %923 = vmatpush.msra.mxu0 0.0
        %924 = vmatpush.msra.mxu0 0.0
        %925 = vmatpush.msra.mxu0 0.0
        %926 = vmatpush.msra.mxu0 0.0
        %927 = vmatpush.msra.mxu0 0.0
        %928 = vmatpush.msra.mxu0 0.0
        %929 = vmatpush.msra.mxu0 0.0
        %930 = vmatpush.msra.mxu0 %v913
        %931 = vmatmul.f32.gmra.mxu0 %v848
        %v932 = vpop.f32.mrf.mxu0
        %v933 = vadd.f32 0.0, %v932
        %934 = vmatmul.f32.gmra.mxu0 %v850
        %v935 = vpop.f32.mrf.mxu0
        %v936 = vadd.f32 0.0, %v935
        %937 = vmatmul.f32.gmra.mxu0 %v852
        %v938 = vpop.f32.mrf.mxu0
        %v939 = vadd.f32 0.0, %v938
        %940 = vmatmul.f32.gmra.mxu0 %v854
        %v941 = vpop.f32.mrf.mxu0
        %v942 = vadd.f32 0.0, %v941
        %943 = vmatmul.f32.gmra.mxu0 %v856
        %v944 = vpop.f32.mrf.mxu0
        %v945 = vadd.f32 0.0, %v944
        %946 = vmatmul.f32.gmra.mxu0 %v858
        %v947 = vpop.f32.mrf.mxu0
        %v948 = vadd.f32 0.0, %v947
        %949 = vmatmul.f32.gmra.mxu0 %v860
        %v950 = vpop.f32.mrf.mxu0
        %v951 = vadd.f32 0.0, %v950
        %952 = vmatmul.f32.gmra.mxu0 %v862
        %v953 = vpop.f32.mrf.mxu0
        %v954 = vadd.f32 0.0, %v953
        %955 = vmatmul.f32.gmra.mxu0 %v864
        %v956 = vpop.f32.mrf.mxu0
        %v957 = vadd.f32 0.0, %v956
        %958 = vmatmul.f32.gmra.mxu0 %v866
        %v959 = vpop.f32.mrf.mxu0
        %v960 = vadd.f32 0.0, %v959
        %961 = vmatmul.f32.gmra.mxu0 %v868
        %v962 = vpop.f32.mrf.mxu0
        %v963 = vadd.f32 0.0, %v962
        %964 = vmatmul.f32.gmra.mxu0 %v870
        %v965 = vpop.f32.mrf.mxu0
        %v966 = vadd.f32 0.0, %v965
        %967 = vmatmul.f32.gmra.mxu0 %v872
        %v968 = vpop.f32.mrf.mxu0
        %v969 = vadd.f32 0.0, %v968
        %970 = vmatmul.f32.gmra.mxu0 %v874
        %v971 = vpop.f32.mrf.mxu0
        %v972 = vadd.f32 0.0, %v971
        %973 = vmatmul.f32.gmra.mxu0 %v876
        %v974 = vpop.f32.mrf.mxu0
        %v975 = vadd.f32 0.0, %v974
        %976 = vmatmul.f32.gmra.mxu0 %v878
        %v977 = vpop.f32.mrf.mxu0
        %v978 = vadd.f32 0.0, %v977
        %979 = vmatmul.f32.gmra.mxu0 %v880
        %v980 = vpop.f32.mrf.mxu0
        %v981 = vadd.f32 0.0, %v980
        %982 = vmatmul.f32.gmra.mxu0 %v882
        %v983 = vpop.f32.mrf.mxu0
        %v984 = vadd.f32 0.0, %v983
        %985 = vmatmul.f32.gmra.mxu0 %v884
        %v986 = vpop.f32.mrf.mxu0
        %v987 = vadd.f32 0.0, %v986
        %988 = vmatmul.f32.gmra.mxu0 %v886
        %v989 = vpop.f32.mrf.mxu0
        %v990 = vadd.f32 0.0, %v989
        %991 = vmatmul.f32.gmra.mxu0 %v888
        %v992 = vpop.f32.mrf.mxu0
        %v993 = vadd.f32 0.0, %v992
        %994 = vmatmul.f32.gmra.mxu0 %v890
        %v995 = vpop.f32.mrf.mxu0
        %v996 = vadd.f32 0.0, %v995
        %997 = vmatmul.f32.gmra.mxu0 %v892
        %v998 = vpop.f32.mrf.mxu0
        %v999 = vadd.f32 0.0, %v998
        %1000 = vmatmul.f32.gmra.mxu0 %v894
        %v1001 = vpop.f32.mrf.mxu0
        %v1002 = vadd.f32 0.0, %v1001
        %1003 = vmatmul.f32.gmra.mxu0 %v896
        %v1004 = vpop.f32.mrf.mxu0
        %v1005 = vadd.f32 0.0, %v1004
        %1006 = vmatmul.f32.gmra.mxu0 %v898
        %v1007 = vpop.f32.mrf.mxu0
        %v1008 = vadd.f32 0.0, %v1007
        %1009 = vmatmul.f32.gmra.mxu0 %v900
        %v1010 = vpop.f32.mrf.mxu0
        %v1011 = vadd.f32 0.0, %v1010
        %1012 = vmatmul.f32.gmra.mxu0 %v902
        %v1013 = vpop.f32.mrf.mxu0
        %v1014 = vadd.f32 0.0, %v1013
        %1015 = vmatmul.f32.gmra.mxu0 %v904
        %v1016 = vpop.f32.mrf.mxu0
        %v1017 = vadd.f32 0.0, %v1016
        %1018 = vmatmul.f32.gmra.mxu0 %v906
        %v1019 = vpop.f32.mrf.mxu0
        %v1020 = vadd.f32 0.0, %v1019
        %1021 = vmatmul.f32.gmra.mxu0 %v908
        %v1022 = vpop.f32.mrf.mxu0
        %v1023 = vadd.f32 0.0, %v1022
        %1024 = vmatmul.f32.gmra.mxu0 %v910
        %v1025 = vpop.f32.mrf.mxu0
        %v1026 = vadd.f32 0.0, %v1025
        %1027 = vdwg.mxu0
        %v1028 = vadd.f32 %v672, %v933
        %v1029 = vadd.f32 %v675, %v936
        %v1030 = vadd.f32 %v678, %v939
        %v1031 = vadd.f32 %v681, %v942
        %v1032 = vadd.f32 %v684, %v945
        %v1033 = vadd.f32 %v687, %v948
        %v1034 = vadd.f32 %v690, %v951
        %v1035 = vadd.f32 %v693, %v954
        %v1036 = vadd.f32 %v696, %v957
        %v1037 = vadd.f32 %v699, %v960
        %v1038 = vadd.f32 %v702, %v963
        %v1039 = vadd.f32 %v705, %v966
        %v1040 = vadd.f32 %v708, %v969
        %v1041 = vadd.f32 %v711, %v972
        %v1042 = vadd.f32 %v714, %v975
        %v1043 = vadd.f32 %v717, %v978
        %v1044 = vadd.f32 %v720, %v981
        %v1045 = vadd.f32 %v723, %v984
        %v1046 = vadd.f32 %v726, %v987
        %v1047 = vadd.f32 %v729, %v990
        %v1048 = vadd.f32 %v732, %v993
        %v1049 = vadd.f32 %v735, %v996
        %v1050 = vadd.f32 %v738, %v999
        %v1051 = vadd.f32 %v741, %v1002
        %v1052 = vadd.f32 %v744, %v1005
        %v1053 = vadd.f32 %v747, %v1008
        %v1054 = vadd.f32 %v750, %v1011
        %v1055 = vadd.f32 %v753, %v1014
        %v1056 = vadd.f32 %v756, %v1017
        %v1057 = vadd.f32 %v759, %v1020
        %v1058 = vadd.f32 %v762, %v1023
        %v1059 = vadd.f32 %v765, %v1026
        %v1061 = vsel %vm405, %v261, 0
        %v1064 = vsel %vm405, %v262, 0
        %v1067 = vsel %vm470, %v270, 0
        %1069 = vmatpush.msra.mxu0 0.0
        %1070 = vmatpush.msra.mxu0 0.0
        %1071 = vmatpush.msra.mxu0 0.0
        %1072 = vmatpush.msra.mxu0 0.0
        %1073 = vmatpush.msra.mxu0 0.0
        %1074 = vmatpush.msra.mxu0 0.0
        %1075 = vmatpush.msra.mxu0 0.0
        %1076 = vmatpush.msra.mxu0 0.0
        %1077 = vmatpush.msra.mxu0 0.0
        %1078 = vmatpush.msra.mxu0 0.0
        %1079 = vmatpush.msra.mxu0 0.0
        %1080 = vmatpush.msra.mxu0 0.0
        %1081 = vmatpush.msra.mxu0 0.0
        %1082 = vmatpush.msra.mxu0 0.0
        %1083 = vmatpush.msra.mxu0 0.0
        %1084 = vmatpush.msra.mxu0 %v1067
        %1085 = vmatmul.f32.gmra.mxu0 %v591
        %v1086 = vpop.f32.mrf.mxu0
        %v1087 = vadd.f32 0.0, %v1086
        %1088 = vmatmul.f32.gmra.mxu0 %v593
        %v1089 = vpop.f32.mrf.mxu0
        %v1090 = vadd.f32 0.0, %v1089
        %1091 = vmatmul.f32.gmra.mxu0 %v595
        %v1092 = vpop.f32.mrf.mxu0
        %v1093 = vadd.f32 0.0, %v1092
        %1094 = vmatmul.f32.gmra.mxu0 %v597
        %v1095 = vpop.f32.mrf.mxu0
        %v1096 = vadd.f32 0.0, %v1095
        %1097 = vmatmul.f32.gmra.mxu0 %v599
        %v1098 = vpop.f32.mrf.mxu0
        %v1099 = vadd.f32 0.0, %v1098
        %1100 = vmatmul.f32.gmra.mxu0 %v601
        %v1101 = vpop.f32.mrf.mxu0
        %v1102 = vadd.f32 0.0, %v1101
        %1103 = vmatmul.f32.gmra.mxu0 %v603
        %v1104 = vpop.f32.mrf.mxu0
        %v1105 = vadd.f32 0.0, %v1104
        %1106 = vmatmul.f32.gmra.mxu0 %v605
        %v1107 = vpop.f32.mrf.mxu0
        %v1108 = vadd.f32 0.0, %v1107
        %1109 = vmatmul.f32.gmra.mxu0 %v607
        %v1110 = vpop.f32.mrf.mxu0
        %v1111 = vadd.f32 0.0, %v1110
        %1112 = vmatmul.f32.gmra.mxu0 %v609
        %v1113 = vpop.f32.mrf.mxu0
        %v1114 = vadd.f32 0.0, %v1113
        %1115 = vmatmul.f32.gmra.mxu0 %v611
        %v1116 = vpop.f32.mrf.mxu0
        %v1117 = vadd.f32 0.0, %v1116
        %1118 = vmatmul.f32.gmra.mxu0 %v613
        %v1119 = vpop.f32.mrf.mxu0
        %v1120 = vadd.f32 0.0, %v1119
        %1121 = vmatmul.f32.gmra.mxu0 %v615
        %v1122 = vpop.f32.mrf.mxu0
        %v1123 = vadd.f32 0.0, %v1122
        %1124 = vmatmul.f32.gmra.mxu0 %v617
        %v1125 = vpop.f32.mrf.mxu0
        %v1126 = vadd.f32 0.0, %v1125
        %1127 = vmatmul.f32.gmra.mxu0 %v619
        %v1128 = vpop.f32.mrf.mxu0
        %v1129 = vadd.f32 0.0, %v1128
        %1130 = vmatmul.f32.gmra.mxu0 %v621
        %v1131 = vpop.f32.mrf.mxu0
        %v1132 = vadd.f32 0.0, %v1131
        %1133 = vmatmul.f32.gmra.mxu0 %v623
        %v1134 = vpop.f32.mrf.mxu0
        %v1135 = vadd.f32 0.0, %v1134
        %1136 = vmatmul.f32.gmra.mxu0 %v625
        %v1137 = vpop.f32.mrf.mxu0
        %v1138 = vadd.f32 0.0, %v1137
        %1139 = vmatmul.f32.gmra.mxu0 %v627
        %v1140 = vpop.f32.mrf.mxu0
        %v1141 = vadd.f32 0.0, %v1140
        %1142 = vmatmul.f32.gmra.mxu0 %v629
        %v1143 = vpop.f32.mrf.mxu0
        %v1144 = vadd.f32 0.0, %v1143
        %1145 = vmatmul.f32.gmra.mxu0 %v631
        %v1146 = vpop.f32.mrf.mxu0
        %v1147 = vadd.f32 0.0, %v1146
        %1148 = vmatmul.f32.gmra.mxu0 %v633
        %v1149 = vpop.f32.mrf.mxu0
        %v1150 = vadd.f32 0.0, %v1149
        %1151 = vmatmul.f32.gmra.mxu0 %v635
        %v1152 = vpop.f32.mrf.mxu0
        %v1153 = vadd.f32 0.0, %v1152
        %1154 = vmatmul.f32.gmra.mxu0 %v637
        %v1155 = vpop.f32.mrf.mxu0
        %v1156 = vadd.f32 0.0, %v1155
        %1157 = vmatmul.f32.gmra.mxu0 %v639
        %v1158 = vpop.f32.mrf.mxu0
        %v1159 = vadd.f32 0.0, %v1158
        %1160 = vmatmul.f32.gmra.mxu0 %v641
        %v1161 = vpop.f32.mrf.mxu0
        %v1162 = vadd.f32 0.0, %v1161
        %1163 = vmatmul.f32.gmra.mxu0 %v643
        %v1164 = vpop.f32.mrf.mxu0
        %v1165 = vadd.f32 0.0, %v1164
        %1166 = vmatmul.f32.gmra.mxu0 %v645
        %v1167 = vpop.f32.mrf.mxu0
        %v1168 = vadd.f32 0.0, %v1167
        %1169 = vmatmul.f32.gmra.mxu0 %v647
        %v1170 = vpop.f32.mrf.mxu0
        %v1171 = vadd.f32 0.0, %v1170
        %1172 = vmatmul.f32.gmra.mxu0 %v649
        %v1173 = vpop.f32.mrf.mxu0
        %v1174 = vadd.f32 0.0, %v1173
        %1175 = vmatmul.f32.gmra.mxu0 %v1061
        %v1176 = vpop.f32.mrf.mxu0
        %v1177 = vadd.f32 0.0, %v1176
        %1178 = vmatmul.f32.gmra.mxu0 %v1064
        %v1179 = vpop.f32.mrf.mxu0
        %v1180 = vadd.f32 0.0, %v1179
        %1181 = vdwg.mxu0
        %v1182 = vadd.f32 %v1028, %v1087
        %v1183 = vadd.f32 %v1029, %v1090
        %v1184 = vadd.f32 %v1030, %v1093
        %v1185 = vadd.f32 %v1031, %v1096
        %v1186 = vadd.f32 %v1032, %v1099
        %v1187 = vadd.f32 %v1033, %v1102
        %v1188 = vadd.f32 %v1034, %v1105
        %v1189 = vadd.f32 %v1035, %v1108
        %v1190 = vadd.f32 %v1036, %v1111
        %v1191 = vadd.f32 %v1037, %v1114
        %v1192 = vadd.f32 %v1038, %v1117
        %v1193 = vadd.f32 %v1039, %v1120
        %v1194 = vadd.f32 %v1040, %v1123
        %v1195 = vadd.f32 %v1041, %v1126
        %v1196 = vadd.f32 %v1042, %v1129
        %v1197 = vadd.f32 %v1043, %v1132
        %v1198 = vadd.f32 %v1044, %v1135
        %v1199 = vadd.f32 %v1045, %v1138
        %v1200 = vadd.f32 %v1046, %v1141
        %v1201 = vadd.f32 %v1047, %v1144
        %v1202 = vadd.f32 %v1048, %v1147
        %v1203 = vadd.f32 %v1049, %v1150
        %v1204 = vadd.f32 %v1050, %v1153
        %v1205 = vadd.f32 %v1051, %v1156
        %v1206 = vadd.f32 %v1052, %v1159
        %v1207 = vadd.f32 %v1053, %v1162
        %v1208 = vadd.f32 %v1054, %v1165
        %v1209 = vadd.f32 %v1055, %v1168
        %v1210 = vadd.f32 %v1056, %v1171
        %v1211 = vadd.f32 %v1057, %v1174
        %v1212 = vadd.f32 %v1058, %v1177
        %v1213 = vadd.f32 %v1059, %v1180
        %v1215 = vrot.slane %v261, 1
        %v1216 = vrot.slane %v262, 1
        %v1217 = vsel %vm324, %v1215, %v1216
        %v1218 = vrot.slane %v263, 1
        %v1219 = vsel %vm324, %v1216, %v1218
        %v1220 = vsel %vm405, %v1217, 0
        %v1222 = vsel %vm405, %v1219, 0
        %v1225 = vsel %vm470, %v271, 0
        %1227 = vmatpush.msra.mxu0 0.0
        %1228 = vmatpush.msra.mxu0 0.0
        %1229 = vmatpush.msra.mxu0 0.0
        %1230 = vmatpush.msra.mxu0 0.0
        %1231 = vmatpush.msra.mxu0 0.0
        %1232 = vmatpush.msra.mxu0 0.0
        %1233 = vmatpush.msra.mxu0 0.0
        %1234 = vmatpush.msra.mxu0 0.0
        %1235 = vmatpush.msra.mxu0 0.0
        %1236 = vmatpush.msra.mxu0 0.0
        %1237 = vmatpush.msra.mxu0 0.0
        %1238 = vmatpush.msra.mxu0 0.0
        %1239 = vmatpush.msra.mxu0 0.0
        %1240 = vmatpush.msra.mxu0 0.0
        %1241 = vmatpush.msra.mxu0 0.0
        %1242 = vmatpush.msra.mxu0 %v1225
        %1243 = vmatmul.f32.gmra.mxu0 %v410
        %v1244 = vpop.f32.mrf.mxu0
        %v1245 = vadd.f32 0.0, %v1244
        %1246 = vmatmul.f32.gmra.mxu0 %v412
        %v1247 = vpop.f32.mrf.mxu0
        %v1248 = vadd.f32 0.0, %v1247
        %1249 = vmatmul.f32.gmra.mxu0 %v414
        %v1250 = vpop.f32.mrf.mxu0
        %v1251 = vadd.f32 0.0, %v1250
        %1252 = vmatmul.f32.gmra.mxu0 %v416
        %v1253 = vpop.f32.mrf.mxu0
        %v1254 = vadd.f32 0.0, %v1253
        %1255 = vmatmul.f32.gmra.mxu0 %v418
        %v1256 = vpop.f32.mrf.mxu0
        %v1257 = vadd.f32 0.0, %v1256
        %1258 = vmatmul.f32.gmra.mxu0 %v420
        %v1259 = vpop.f32.mrf.mxu0
        %v1260 = vadd.f32 0.0, %v1259
        %1261 = vmatmul.f32.gmra.mxu0 %v422
        %v1262 = vpop.f32.mrf.mxu0
        %v1263 = vadd.f32 0.0, %v1262
        %1264 = vmatmul.f32.gmra.mxu0 %v424
        %v1265 = vpop.f32.mrf.mxu0
        %v1266 = vadd.f32 0.0, %v1265
        %1267 = vmatmul.f32.gmra.mxu0 %v426
        %v1268 = vpop.f32.mrf.mxu0
        %v1269 = vadd.f32 0.0, %v1268
        %1270 = vmatmul.f32.gmra.mxu0 %v428
        %v1271 = vpop.f32.mrf.mxu0
        %v1272 = vadd.f32 0.0, %v1271
        %1273 = vmatmul.f32.gmra.mxu0 %v430
        %v1274 = vpop.f32.mrf.mxu0
        %v1275 = vadd.f32 0.0, %v1274
        %1276 = vmatmul.f32.gmra.mxu0 %v432
        %v1277 = vpop.f32.mrf.mxu0
        %v1278 = vadd.f32 0.0, %v1277
        %1279 = vmatmul.f32.gmra.mxu0 %v434
        %v1280 = vpop.f32.mrf.mxu0
        %v1281 = vadd.f32 0.0, %v1280
        %1282 = vmatmul.f32.gmra.mxu0 %v436
        %v1283 = vpop.f32.mrf.mxu0
        %v1284 = vadd.f32 0.0, %v1283
        %1285 = vmatmul.f32.gmra.mxu0 %v438
        %v1286 = vpop.f32.mrf.mxu0
        %v1287 = vadd.f32 0.0, %v1286
        %1288 = vmatmul.f32.gmra.mxu0 %v440
        %v1289 = vpop.f32.mrf.mxu0
        %v1290 = vadd.f32 0.0, %v1289
        %1291 = vmatmul.f32.gmra.mxu0 %v442
        %v1292 = vpop.f32.mrf.mxu0
        %v1293 = vadd.f32 0.0, %v1292
        %1294 = vmatmul.f32.gmra.mxu0 %v444
        %v1295 = vpop.f32.mrf.mxu0
        %v1296 = vadd.f32 0.0, %v1295
        %1297 = vmatmul.f32.gmra.mxu0 %v446
        %v1298 = vpop.f32.mrf.mxu0
        %v1299 = vadd.f32 0.0, %v1298
        %1300 = vmatmul.f32.gmra.mxu0 %v448
        %v1301 = vpop.f32.mrf.mxu0
        %v1302 = vadd.f32 0.0, %v1301
        %1303 = vmatmul.f32.gmra.mxu0 %v450
        %v1304 = vpop.f32.mrf.mxu0
        %v1305 = vadd.f32 0.0, %v1304
        %1306 = vmatmul.f32.gmra.mxu0 %v452
        %v1307 = vpop.f32.mrf.mxu0
        %v1308 = vadd.f32 0.0, %v1307
        %1309 = vmatmul.f32.gmra.mxu0 %v454
        %v1310 = vpop.f32.mrf.mxu0
        %v1311 = vadd.f32 0.0, %v1310
        %1312 = vmatmul.f32.gmra.mxu0 %v456
        %v1313 = vpop.f32.mrf.mxu0
        %v1314 = vadd.f32 0.0, %v1313
        %1315 = vmatmul.f32.gmra.mxu0 %v458
        %v1316 = vpop.f32.mrf.mxu0
        %v1317 = vadd.f32 0.0, %v1316
        %1318 = vmatmul.f32.gmra.mxu0 %v460
        %v1319 = vpop.f32.mrf.mxu0
        %v1320 = vadd.f32 0.0, %v1319
        %1321 = vmatmul.f32.gmra.mxu0 %v462
        %v1322 = vpop.f32.mrf.mxu0
        %v1323 = vadd.f32 0.0, %v1322
        %1324 = vmatmul.f32.gmra.mxu0 %v464
        %v1325 = vpop.f32.mrf.mxu0
        %v1326 = vadd.f32 0.0, %v1325
        %1327 = vmatmul.f32.gmra.mxu0 %v466
        %v1328 = vpop.f32.mrf.mxu0
        %v1329 = vadd.f32 0.0, %v1328
        %1330 = vmatmul.f32.gmra.mxu0 %v468
        %v1331 = vpop.f32.mrf.mxu0
        %v1332 = vadd.f32 0.0, %v1331
        %1333 = vmatmul.f32.gmra.mxu0 %v1220
        %v1334 = vpop.f32.mrf.mxu0
        %v1335 = vadd.f32 0.0, %v1334
        %1336 = vmatmul.f32.gmra.mxu0 %v1222
        %v1337 = vpop.f32.mrf.mxu0
        %v1338 = vadd.f32 0.0, %v1337
        %1339 = vdwg.mxu0
        %v1340 = vadd.f32 %v1182, %v1245
        %v1341 = vadd.f32 %v1183, %v1248
        %v1342 = vadd.f32 %v1184, %v1251
        %v1343 = vadd.f32 %v1185, %v1254
        %v1344 = vadd.f32 %v1186, %v1257
        %v1345 = vadd.f32 %v1187, %v1260
        %v1346 = vadd.f32 %v1188, %v1263
        %v1347 = vadd.f32 %v1189, %v1266
        %v1348 = vadd.f32 %v1190, %v1269
        %v1349 = vadd.f32 %v1191, %v1272
        %v1350 = vadd.f32 %v1192, %v1275
        %v1351 = vadd.f32 %v1193, %v1278
        %v1352 = vadd.f32 %v1194, %v1281
        %v1353 = vadd.f32 %v1195, %v1284
        %v1354 = vadd.f32 %v1196, %v1287
        %v1355 = vadd.f32 %v1197, %v1290
        %v1356 = vadd.f32 %v1198, %v1293
        %v1357 = vadd.f32 %v1199, %v1296
        %v1358 = vadd.f32 %v1200, %v1299
        %v1359 = vadd.f32 %v1201, %v1302
        %v1360 = vadd.f32 %v1202, %v1305
        %v1361 = vadd.f32 %v1203, %v1308
        %v1362 = vadd.f32 %v1204, %v1311
        %v1363 = vadd.f32 %v1205, %v1314
        %v1364 = vadd.f32 %v1206, %v1317
        %v1365 = vadd.f32 %v1207, %v1320
        %v1366 = vadd.f32 %v1208, %v1323
        %v1367 = vadd.f32 %v1209, %v1326
        %v1368 = vadd.f32 %v1210, %v1329
        %v1369 = vadd.f32 %v1211, %v1332
        %v1370 = vadd.f32 %v1212, %v1335
        %v1371 = vadd.f32 %v1213, %v1338
        %v1372 = vrot.slane %v261, 2
        %v1373 = vrot.slane %v262, 2
        %v1374 = vsel %vm767, %v1372, %v1373
        %v1375 = vrot.slane %v263, 2
        %v1376 = vsel %vm767, %v1373, %v1375
        %v1377 = vsel %vm405, %v1374, 0
        %v1379 = vsel %vm405, %v1376, 0
        %v1382 = vsel %vm470, %v272, 0
        %1384 = vmatpush.msra.mxu0 0.0
        %1385 = vmatpush.msra.mxu0 0.0
        %1386 = vmatpush.msra.mxu0 0.0
        %1387 = vmatpush.msra.mxu0 0.0
        %1388 = vmatpush.msra.mxu0 0.0
        %1389 = vmatpush.msra.mxu0 0.0
        %1390 = vmatpush.msra.mxu0 0.0
        %1391 = vmatpush.msra.mxu0 0.0
        %1392 = vmatpush.msra.mxu0 0.0
        %1393 = vmatpush.msra.mxu0 0.0
        %1394 = vmatpush.msra.mxu0 0.0
        %1395 = vmatpush.msra.mxu0 0.0
        %1396 = vmatpush.msra.mxu0 0.0
        %1397 = vmatpush.msra.mxu0 0.0
        %1398 = vmatpush.msra.mxu0 0.0
        %1399 = vmatpush.msra.mxu0 %v1382
        %1400 = vmatmul.f32.gmra.mxu0 %v852
        %v1401 = vpop.f32.mrf.mxu0
        %v1402 = vadd.f32 0.0, %v1401
        %1403 = vmatmul.f32.gmra.mxu0 %v854
        %v1404 = vpop.f32.mrf.mxu0
        %v1405 = vadd.f32 0.0, %v1404
        %1406 = vmatmul.f32.gmra.mxu0 %v856
        %v1407 = vpop.f32.mrf.mxu0
        %v1408 = vadd.f32 0.0, %v1407
        %1409 = vmatmul.f32.gmra.mxu0 %v858
        %v1410 = vpop.f32.mrf.mxu0
        %v1411 = vadd.f32 0.0, %v1410
        %1412 = vmatmul.f32.gmra.mxu0 %v860
        %v1413 = vpop.f32.mrf.mxu0
        %v1414 = vadd.f32 0.0, %v1413
        %1415 = vmatmul.f32.gmra.mxu0 %v862
        %v1416 = vpop.f32.mrf.mxu0
        %v1417 = vadd.f32 0.0, %v1416
        %1418 = vmatmul.f32.gmra.mxu0 %v864
        %v1419 = vpop.f32.mrf.mxu0
        %v1420 = vadd.f32 0.0, %v1419
        %1421 = vmatmul.f32.gmra.mxu0 %v866
        %v1422 = vpop.f32.mrf.mxu0
        %v1423 = vadd.f32 0.0, %v1422
        %1424 = vmatmul.f32.gmra.mxu0 %v868
        %v1425 = vpop.f32.mrf.mxu0
        %v1426 = vadd.f32 0.0, %v1425
        %1427 = vmatmul.f32.gmra.mxu0 %v870
        %v1428 = vpop.f32.mrf.mxu0
        %v1429 = vadd.f32 0.0, %v1428
        %1430 = vmatmul.f32.gmra.mxu0 %v872
        %v1431 = vpop.f32.mrf.mxu0
        %v1432 = vadd.f32 0.0, %v1431
        %1433 = vmatmul.f32.gmra.mxu0 %v874
        %v1434 = vpop.f32.mrf.mxu0
        %v1435 = vadd.f32 0.0, %v1434
        %1436 = vmatmul.f32.gmra.mxu0 %v876
        %v1437 = vpop.f32.mrf.mxu0
        %v1438 = vadd.f32 0.0, %v1437
        %1439 = vmatmul.f32.gmra.mxu0 %v878
        %v1440 = vpop.f32.mrf.mxu0
        %v1441 = vadd.f32 0.0, %v1440
        %1442 = vmatmul.f32.gmra.mxu0 %v880
        %v1443 = vpop.f32.mrf.mxu0
        %v1444 = vadd.f32 0.0, %v1443
        %1445 = vmatmul.f32.gmra.mxu0 %v882
        %v1446 = vpop.f32.mrf.mxu0
        %v1447 = vadd.f32 0.0, %v1446
        %1448 = vmatmul.f32.gmra.mxu0 %v884
        %v1449 = vpop.f32.mrf.mxu0
        %v1450 = vadd.f32 0.0, %v1449
        %1451 = vmatmul.f32.gmra.mxu0 %v886
        %v1452 = vpop.f32.mrf.mxu0
        %v1453 = vadd.f32 0.0, %v1452
        %1454 = vmatmul.f32.gmra.mxu0 %v888
        %v1455 = vpop.f32.mrf.mxu0
        %v1456 = vadd.f32 0.0, %v1455
        %1457 = vmatmul.f32.gmra.mxu0 %v890
        %v1458 = vpop.f32.mrf.mxu0
        %v1459 = vadd.f32 0.0, %v1458
        %1460 = vmatmul.f32.gmra.mxu0 %v892
        %v1461 = vpop.f32.mrf.mxu0
        %v1462 = vadd.f32 0.0, %v1461
        %1463 = vmatmul.f32.gmra.mxu0 %v894
        %v1464 = vpop.f32.mrf.mxu0
        %v1465 = vadd.f32 0.0, %v1464
        %1466 = vmatmul.f32.gmra.mxu0 %v896
        %v1467 = vpop.f32.mrf.mxu0
        %v1468 = vadd.f32 0.0, %v1467
        %1469 = vmatmul.f32.gmra.mxu0 %v898
        %v1470 = vpop.f32.mrf.mxu0
        %v1471 = vadd.f32 0.0, %v1470
        %1472 = vmatmul.f32.gmra.mxu0 %v900
        %v1473 = vpop.f32.mrf.mxu0
        %v1474 = vadd.f32 0.0, %v1473
        %1475 = vmatmul.f32.gmra.mxu0 %v902
        %v1476 = vpop.f32.mrf.mxu0
        %v1477 = vadd.f32 0.0, %v1476
        %1478 = vmatmul.f32.gmra.mxu0 %v904
        %v1479 = vpop.f32.mrf.mxu0
        %v1480 = vadd.f32 0.0, %v1479
        %1481 = vmatmul.f32.gmra.mxu0 %v906
        %v1482 = vpop.f32.mrf.mxu0
        %v1483 = vadd.f32 0.0, %v1482
        %1484 = vmatmul.f32.gmra.mxu0 %v908
        %v1485 = vpop.f32.mrf.mxu0
        %v1486 = vadd.f32 0.0, %v1485
        %1487 = vmatmul.f32.gmra.mxu0 %v910
        %v1488 = vpop.f32.mrf.mxu0
        %v1489 = vadd.f32 0.0, %v1488
        %1490 = vmatmul.f32.gmra.mxu0 %v1377
        %v1491 = vpop.f32.mrf.mxu0
        %v1492 = vadd.f32 0.0, %v1491
        %1493 = vmatmul.f32.gmra.mxu0 %v1379
        %v1494 = vpop.f32.mrf.mxu0
        %v1495 = vadd.f32 0.0, %v1494
        %1496 = vdwg.mxu0
        %v1497 = vadd.f32 %v1340, %v1402
        %v1498 = vadd.f32 %v1341, %v1405
        %v1499 = vadd.f32 %v1342, %v1408
        %v1500 = vadd.f32 %v1343, %v1411
        %v1501 = vadd.f32 %v1344, %v1414
        %v1502 = vadd.f32 %v1345, %v1417
        %v1503 = vadd.f32 %v1346, %v1420
        %v1504 = vadd.f32 %v1347, %v1423
        %v1505 = vadd.f32 %v1348, %v1426
        %v1506 = vadd.f32 %v1349, %v1429
        %v1507 = vadd.f32 %v1350, %v1432
        %v1508 = vadd.f32 %v1351, %v1435
        %v1509 = vadd.f32 %v1352, %v1438
        %v1510 = vadd.f32 %v1353, %v1441
        %v1511 = vadd.f32 %v1354, %v1444
        %v1512 = vadd.f32 %v1355, %v1447
        %v1513 = vadd.f32 %v1356, %v1450
        %v1514 = vadd.f32 %v1357, %v1453
        %v1515 = vadd.f32 %v1358, %v1456
        %v1516 = vadd.f32 %v1359, %v1459
        %v1517 = vadd.f32 %v1360, %v1462
        %v1518 = vadd.f32 %v1361, %v1465
        %v1519 = vadd.f32 %v1362, %v1468
        %v1520 = vadd.f32 %v1363, %v1471
        %v1521 = vadd.f32 %v1364, %v1474
        %v1522 = vadd.f32 %v1365, %v1477
        %v1523 = vadd.f32 %v1366, %v1480
        %v1524 = vadd.f32 %v1367, %v1483
        %v1525 = vadd.f32 %v1368, %v1486
        %v1526 = vadd.f32 %v1369, %v1489
        %v1527 = vadd.f32 %v1370, %v1492
        %v1528 = vadd.f32 %v1371, %v1495
        %v1530 = vsel %vm405, %v264, 0
        %v1533 = vsel %vm405, %v265, 0
        %v1536 = vsel %vm470, %v273, 0
        %1538 = vmatpush.msra.mxu0 0.0
        %1539 = vmatpush.msra.mxu0 0.0
        %1540 = vmatpush.msra.mxu0 0.0
        %1541 = vmatpush.msra.mxu0 0.0
        %1542 = vmatpush.msra.mxu0 0.0
        %1543 = vmatpush.msra.mxu0 0.0
        %1544 = vmatpush.msra.mxu0 0.0
        %1545 = vmatpush.msra.mxu0 0.0
        %1546 = vmatpush.msra.mxu0 0.0
        %1547 = vmatpush.msra.mxu0 0.0
        %1548 = vmatpush.msra.mxu0 0.0
        %1549 = vmatpush.msra.mxu0 0.0
        %1550 = vmatpush.msra.mxu0 0.0
        %1551 = vmatpush.msra.mxu0 0.0
        %1552 = vmatpush.msra.mxu0 0.0
        %1553 = vmatpush.msra.mxu0 %v1536
        %1554 = vmatmul.f32.gmra.mxu0 %v595
        %v1555 = vpop.f32.mrf.mxu0
        %v1556 = vadd.f32 0.0, %v1555
        %1557 = vmatmul.f32.gmra.mxu0 %v597
        %v1558 = vpop.f32.mrf.mxu0
        %v1559 = vadd.f32 0.0, %v1558
        %1560 = vmatmul.f32.gmra.mxu0 %v599
        %v1561 = vpop.f32.mrf.mxu0
        %v1562 = vadd.f32 0.0, %v1561
        %1563 = vmatmul.f32.gmra.mxu0 %v601
        %v1564 = vpop.f32.mrf.mxu0
        %v1565 = vadd.f32 0.0, %v1564
        %1566 = vmatmul.f32.gmra.mxu0 %v603
        %v1567 = vpop.f32.mrf.mxu0
        %v1568 = vadd.f32 0.0, %v1567
        %1569 = vmatmul.f32.gmra.mxu0 %v605
        %v1570 = vpop.f32.mrf.mxu0
        %v1571 = vadd.f32 0.0, %v1570
        %1572 = vmatmul.f32.gmra.mxu0 %v607
        %v1573 = vpop.f32.mrf.mxu0
        %v1574 = vadd.f32 0.0, %v1573
        %1575 = vmatmul.f32.gmra.mxu0 %v609
        %v1576 = vpop.f32.mrf.mxu0
        %v1577 = vadd.f32 0.0, %v1576
        %1578 = vmatmul.f32.gmra.mxu0 %v611
        %v1579 = vpop.f32.mrf.mxu0
        %v1580 = vadd.f32 0.0, %v1579
        %1581 = vmatmul.f32.gmra.mxu0 %v613
        %v1582 = vpop.f32.mrf.mxu0
        %v1583 = vadd.f32 0.0, %v1582
        %1584 = vmatmul.f32.gmra.mxu0 %v615
        %v1585 = vpop.f32.mrf.mxu0
        %v1586 = vadd.f32 0.0, %v1585
        %1587 = vmatmul.f32.gmra.mxu0 %v617
        %v1588 = vpop.f32.mrf.mxu0
        %v1589 = vadd.f32 0.0, %v1588
        %1590 = vmatmul.f32.gmra.mxu0 %v619
        %v1591 = vpop.f32.mrf.mxu0
        %v1592 = vadd.f32 0.0, %v1591
        %1593 = vmatmul.f32.gmra.mxu0 %v621
        %v1594 = vpop.f32.mrf.mxu0
        %v1595 = vadd.f32 0.0, %v1594
        %1596 = vmatmul.f32.gmra.mxu0 %v623
        %v1597 = vpop.f32.mrf.mxu0
        %v1598 = vadd.f32 0.0, %v1597
        %1599 = vmatmul.f32.gmra.mxu0 %v625
        %v1600 = vpop.f32.mrf.mxu0
        %v1601 = vadd.f32 0.0, %v1600
        %1602 = vmatmul.f32.gmra.mxu0 %v627
        %v1603 = vpop.f32.mrf.mxu0
        %v1604 = vadd.f32 0.0, %v1603
        %1605 = vmatmul.f32.gmra.mxu0 %v629
        %v1606 = vpop.f32.mrf.mxu0
        %v1607 = vadd.f32 0.0, %v1606
        %1608 = vmatmul.f32.gmra.mxu0 %v631
        %v1609 = vpop.f32.mrf.mxu0
        %v1610 = vadd.f32 0.0, %v1609
        %1611 = vmatmul.f32.gmra.mxu0 %v633
        %v1612 = vpop.f32.mrf.mxu0
        %v1613 = vadd.f32 0.0, %v1612
        %1614 = vmatmul.f32.gmra.mxu0 %v635
        %v1615 = vpop.f32.mrf.mxu0
        %v1616 = vadd.f32 0.0, %v1615
        %1617 = vmatmul.f32.gmra.mxu0 %v637
        %v1618 = vpop.f32.mrf.mxu0
        %v1619 = vadd.f32 0.0, %v1618
        %1620 = vmatmul.f32.gmra.mxu0 %v639
        %v1621 = vpop.f32.mrf.mxu0
        %v1622 = vadd.f32 0.0, %v1621
        %1623 = vmatmul.f32.gmra.mxu0 %v641
        %v1624 = vpop.f32.mrf.mxu0
        %v1625 = vadd.f32 0.0, %v1624
        %1626 = vmatmul.f32.gmra.mxu0 %v643
        %v1627 = vpop.f32.mrf.mxu0
        %v1628 = vadd.f32 0.0, %v1627
        %1629 = vmatmul.f32.gmra.mxu0 %v645
        %v1630 = vpop.f32.mrf.mxu0
        %v1631 = vadd.f32 0.0, %v1630
        %1632 = vmatmul.f32.gmra.mxu0 %v647
        %v1633 = vpop.f32.mrf.mxu0
        %v1634 = vadd.f32 0.0, %v1633
        %1635 = vmatmul.f32.gmra.mxu0 %v649
        %v1636 = vpop.f32.mrf.mxu0
        %v1637 = vadd.f32 0.0, %v1636
        %1638 = vmatmul.f32.gmra.mxu0 %v1061
        %v1639 = vpop.f32.mrf.mxu0
        %v1640 = vadd.f32 0.0, %v1639
        %1641 = vmatmul.f32.gmra.mxu0 %v1064
        %v1642 = vpop.f32.mrf.mxu0
        %v1643 = vadd.f32 0.0, %v1642
        %1644 = vmatmul.f32.gmra.mxu0 %v1530
        %v1645 = vpop.f32.mrf.mxu0
        %v1646 = vadd.f32 0.0, %v1645
        %1647 = vmatmul.f32.gmra.mxu0 %v1533
        %v1648 = vpop.f32.mrf.mxu0
        %v1649 = vadd.f32 0.0, %v1648
        %1650 = vdwg.mxu0
        %v1651 = vadd.f32 %v1497, %v1556
        %v1652 = vadd.f32 %v1498, %v1559
        %v1653 = vadd.f32 %v1499, %v1562
        %v1654 = vadd.f32 %v1500, %v1565
        %v1655 = vadd.f32 %v1501, %v1568
        %v1656 = vadd.f32 %v1502, %v1571
        %v1657 = vadd.f32 %v1503, %v1574
        %v1658 = vadd.f32 %v1504, %v1577
        %v1659 = vadd.f32 %v1505, %v1580
        %v1660 = vadd.f32 %v1506, %v1583
        %v1661 = vadd.f32 %v1507, %v1586
        %v1662 = vadd.f32 %v1508, %v1589
        %v1663 = vadd.f32 %v1509, %v1592
        %v1664 = vadd.f32 %v1510, %v1595
        %v1665 = vadd.f32 %v1511, %v1598
        %v1666 = vadd.f32 %v1512, %v1601
        %v1667 = vadd.f32 %v1513, %v1604
        %v1668 = vadd.f32 %v1514, %v1607
        %v1669 = vadd.f32 %v1515, %v1610
        %v1670 = vadd.f32 %v1516, %v1613
        %v1671 = vadd.f32 %v1517, %v1616
        %v1672 = vadd.f32 %v1518, %v1619
        %v1673 = vadd.f32 %v1519, %v1622
        %v1674 = vadd.f32 %v1520, %v1625
        %v1675 = vadd.f32 %v1521, %v1628
        %v1676 = vadd.f32 %v1522, %v1631
        %v1677 = vadd.f32 %v1523, %v1634
        %v1678 = vadd.f32 %v1524, %v1637
        %v1679 = vadd.f32 %v1525, %v1640
        %v1680 = vadd.f32 %v1526, %v1643
        %v1681 = vadd.f32 %v1527, %v1646
        %v1682 = vadd.f32 %v1528, %v1649
        %v1684 = vrot.slane %v264, 1
        %v1685 = vrot.slane %v265, 1
        %v1686 = vsel %vm324, %v1684, %v1685
        %v1687 = vrot.slane %v266, 1
        %v1688 = vsel %vm324, %v1685, %v1687
        %v1689 = vsel %vm405, %v1686, 0
        %v1691 = vsel %vm405, %v1688, 0
        %v1694 = vsel %vm470, %v274, 0
        %1696 = vmatpush.msra.mxu0 0.0
        %1697 = vmatpush.msra.mxu0 0.0
        %1698 = vmatpush.msra.mxu0 0.0
        %1699 = vmatpush.msra.mxu0 0.0
        %1700 = vmatpush.msra.mxu0 0.0
        %1701 = vmatpush.msra.mxu0 0.0
        %1702 = vmatpush.msra.mxu0 0.0
        %1703 = vmatpush.msra.mxu0 0.0
        %1704 = vmatpush.msra.mxu0 0.0
        %1705 = vmatpush.msra.mxu0 0.0
        %1706 = vmatpush.msra.mxu0 0.0
        %1707 = vmatpush.msra.mxu0 0.0
        %1708 = vmatpush.msra.mxu0 0.0
        %1709 = vmatpush.msra.mxu0 0.0
        %1710 = vmatpush.msra.mxu0 0.0
        %1711 = vmatpush.msra.mxu0 %v1694
        %1712 = vmatmul.f32.gmra.mxu0 %v414
        %v1713 = vpop.f32.mrf.mxu0
        %v1714 = vadd.f32 0.0, %v1713
        %1715 = vmatmul.f32.gmra.mxu0 %v416
        %v1716 = vpop.f32.mrf.mxu0
        %v1717 = vadd.f32 0.0, %v1716
        %1718 = vmatmul.f32.gmra.mxu0 %v418
        %v1719 = vpop.f32.mrf.mxu0
        %v1720 = vadd.f32 0.0, %v1719
        %1721 = vmatmul.f32.gmra.mxu0 %v420
        %v1722 = vpop.f32.mrf.mxu0
        %v1723 = vadd.f32 0.0, %v1722
        %1724 = vmatmul.f32.gmra.mxu0 %v422
        %v1725 = vpop.f32.mrf.mxu0
        %v1726 = vadd.f32 0.0, %v1725
        %1727 = vmatmul.f32.gmra.mxu0 %v424
        %v1728 = vpop.f32.mrf.mxu0
        %v1729 = vadd.f32 0.0, %v1728
        %1730 = vmatmul.f32.gmra.mxu0 %v426
        %v1731 = vpop.f32.mrf.mxu0
        %v1732 = vadd.f32 0.0, %v1731
        %1733 = vmatmul.f32.gmra.mxu0 %v428
        %v1734 = vpop.f32.mrf.mxu0
        %v1735 = vadd.f32 0.0, %v1734
        %1736 = vmatmul.f32.gmra.mxu0 %v430
        %v1737 = vpop.f32.mrf.mxu0
        %v1738 = vadd.f32 0.0, %v1737
        %1739 = vmatmul.f32.gmra.mxu0 %v432
        %v1740 = vpop.f32.mrf.mxu0
        %v1741 = vadd.f32 0.0, %v1740
        %1742 = vmatmul.f32.gmra.mxu0 %v434
        %v1743 = vpop.f32.mrf.mxu0
        %v1744 = vadd.f32 0.0, %v1743
        %1745 = vmatmul.f32.gmra.mxu0 %v436
        %v1746 = vpop.f32.mrf.mxu0
        %v1747 = vadd.f32 0.0, %v1746
        %1748 = vmatmul.f32.gmra.mxu0 %v438
        %v1749 = vpop.f32.mrf.mxu0
        %v1750 = vadd.f32 0.0, %v1749
        %1751 = vmatmul.f32.gmra.mxu0 %v440
        %v1752 = vpop.f32.mrf.mxu0
        %v1753 = vadd.f32 0.0, %v1752
        %1754 = vmatmul.f32.gmra.mxu0 %v442
        %v1755 = vpop.f32.mrf.mxu0
        %v1756 = vadd.f32 0.0, %v1755
        %1757 = vmatmul.f32.gmra.mxu0 %v444
        %v1758 = vpop.f32.mrf.mxu0
        %v1759 = vadd.f32 0.0, %v1758
        %1760 = vmatmul.f32.gmra.mxu0 %v446
        %v1761 = vpop.f32.mrf.mxu0
        %v1762 = vadd.f32 0.0, %v1761
        %1763 = vmatmul.f32.gmra.mxu0 %v448
        %v1764 = vpop.f32.mrf.mxu0
        %v1765 = vadd.f32 0.0, %v1764
        %1766 = vmatmul.f32.gmra.mxu0 %v450
        %v1767 = vpop.f32.mrf.mxu0
        %v1768 = vadd.f32 0.0, %v1767
        %1769 = vmatmul.f32.gmra.mxu0 %v452
        %v1770 = vpop.f32.mrf.mxu0
        %v1771 = vadd.f32 0.0, %v1770
        %1772 = vmatmul.f32.gmra.mxu0 %v454
        %v1773 = vpop.f32.mrf.mxu0
        %v1774 = vadd.f32 0.0, %v1773
        %1775 = vmatmul.f32.gmra.mxu0 %v456
        %v1776 = vpop.f32.mrf.mxu0
        %v1777 = vadd.f32 0.0, %v1776
        %1778 = vmatmul.f32.gmra.mxu0 %v458
        %v1779 = vpop.f32.mrf.mxu0
        %v1780 = vadd.f32 0.0, %v1779
        %1781 = vmatmul.f32.gmra.mxu0 %v460
        %v1782 = vpop.f32.mrf.mxu0
        %v1783 = vadd.f32 0.0, %v1782
        %1784 = vmatmul.f32.gmra.mxu0 %v462
        %v1785 = vpop.f32.mrf.mxu0
        %v1786 = vadd.f32 0.0, %v1785
        %1787 = vmatmul.f32.gmra.mxu0 %v464
        %v1788 = vpop.f32.mrf.mxu0
        %v1789 = vadd.f32 0.0, %v1788
        %1790 = vmatmul.f32.gmra.mxu0 %v466
        %v1791 = vpop.f32.mrf.mxu0
        %v1792 = vadd.f32 0.0, %v1791
        %1793 = vmatmul.f32.gmra.mxu0 %v468
        %v1794 = vpop.f32.mrf.mxu0
        %v1795 = vadd.f32 0.0, %v1794
        %1796 = vmatmul.f32.gmra.mxu0 %v1220
        %v1797 = vpop.f32.mrf.mxu0
        %v1798 = vadd.f32 0.0, %v1797
        %1799 = vmatmul.f32.gmra.mxu0 %v1222
        %v1800 = vpop.f32.mrf.mxu0
        %v1801 = vadd.f32 0.0, %v1800
        %1802 = vmatmul.f32.gmra.mxu0 %v1689
        %v1803 = vpop.f32.mrf.mxu0
        %v1804 = vadd.f32 0.0, %v1803
        %1805 = vmatmul.f32.gmra.mxu0 %v1691
        %v1806 = vpop.f32.mrf.mxu0
        %v1807 = vadd.f32 0.0, %v1806
        %1808 = vdwg.mxu0
        %v1809 = vadd.f32 %v1651, %v1714
        %v1810 = vadd.f32 %v1652, %v1717
        %v1811 = vadd.f32 %v1653, %v1720
        %v1812 = vadd.f32 %v1654, %v1723
        %v1813 = vadd.f32 %v1655, %v1726
        %v1814 = vadd.f32 %v1656, %v1729
        %v1815 = vadd.f32 %v1657, %v1732
        %v1816 = vadd.f32 %v1658, %v1735
        %v1817 = vadd.f32 %v1659, %v1738
        %v1818 = vadd.f32 %v1660, %v1741
        %v1819 = vadd.f32 %v1661, %v1744
        %v1820 = vadd.f32 %v1662, %v1747
        %v1821 = vadd.f32 %v1663, %v1750
        %v1822 = vadd.f32 %v1664, %v1753
        %v1823 = vadd.f32 %v1665, %v1756
        %v1824 = vadd.f32 %v1666, %v1759
        %v1825 = vadd.f32 %v1667, %v1762
        %v1826 = vadd.f32 %v1668, %v1765
        %v1827 = vadd.f32 %v1669, %v1768
        %v1828 = vadd.f32 %v1670, %v1771
        %v1829 = vadd.f32 %v1671, %v1774
        %v1830 = vadd.f32 %v1672, %v1777
        %v1831 = vadd.f32 %v1673, %v1780
        %v1832 = vadd.f32 %v1674, %v1783
        %v1833 = vadd.f32 %v1675, %v1786
        %v1834 = vadd.f32 %v1676, %v1789
        %v1835 = vadd.f32 %v1677, %v1792
        %v1836 = vadd.f32 %v1678, %v1795
        %v1837 = vadd.f32 %v1679, %v1798
        %v1838 = vadd.f32 %v1680, %v1801
        %v1839 = vadd.f32 %v1681, %v1804
        %v1840 = vadd.f32 %v1682, %v1807
        %v1841 = vrot.slane %v264, 2
        %v1842 = vrot.slane %v265, 2
        %v1843 = vsel %vm767, %v1841, %v1842
        %v1844 = vrot.slane %v266, 2
        %v1845 = vsel %vm767, %v1842, %v1844
        %v1846 = vsel %vm405, %v1843, 0
        %v1848 = vsel %vm405, %v1845, 0
        %v1851 = vsel %vm470, %v275, 0
        %1853 = vmatpush.msra.mxu0 0.0
        %1854 = vmatpush.msra.mxu0 0.0
        %1855 = vmatpush.msra.mxu0 0.0
        %1856 = vmatpush.msra.mxu0 0.0
        %1857 = vmatpush.msra.mxu0 0.0
        %1858 = vmatpush.msra.mxu0 0.0
        %1859 = vmatpush.msra.mxu0 0.0
        %1860 = vmatpush.msra.mxu0 0.0
        %1861 = vmatpush.msra.mxu0 0.0
        %1862 = vmatpush.msra.mxu0 0.0
        %1863 = vmatpush.msra.mxu0 0.0
        %1864 = vmatpush.msra.mxu0 0.0
        %1865 = vmatpush.msra.mxu0 0.0
        %1866 = vmatpush.msra.mxu0 0.0
        %1867 = vmatpush.msra.mxu0 0.0
        %1868 = vmatpush.msra.mxu0 %v1851
        %1869 = vmatmul.f32.gmra.mxu0 %v856
        %v1870 = vpop.f32.mrf.mxu0
        %v1871 = vadd.f32 0.0, %v1870
        %1872 = vmatmul.f32.gmra.mxu0 %v858
        %v1873 = vpop.f32.mrf.mxu0
        %v1874 = vadd.f32 0.0, %v1873
        %1875 = vmatmul.f32.gmra.mxu0 %v860
        %v1876 = vpop.f32.mrf.mxu0
        %v1877 = vadd.f32 0.0, %v1876
        %1878 = vmatmul.f32.gmra.mxu0 %v862
        %v1879 = vpop.f32.mrf.mxu0
        %v1880 = vadd.f32 0.0, %v1879
        %1881 = vmatmul.f32.gmra.mxu0 %v864
        %v1882 = vpop.f32.mrf.mxu0
        %v1883 = vadd.f32 0.0, %v1882
        %1884 = vmatmul.f32.gmra.mxu0 %v866
        %v1885 = vpop.f32.mrf.mxu0
        %v1886 = vadd.f32 0.0, %v1885
        %1887 = vmatmul.f32.gmra.mxu0 %v868
        %v1888 = vpop.f32.mrf.mxu0
        %v1889 = vadd.f32 0.0, %v1888
        %1890 = vmatmul.f32.gmra.mxu0 %v870
        %v1891 = vpop.f32.mrf.mxu0
        %v1892 = vadd.f32 0.0, %v1891
        %1893 = vmatmul.f32.gmra.mxu0 %v872
        %v1894 = vpop.f32.mrf.mxu0
        %v1895 = vadd.f32 0.0, %v1894
        %1896 = vmatmul.f32.gmra.mxu0 %v874
        %v1897 = vpop.f32.mrf.mxu0
        %v1898 = vadd.f32 0.0, %v1897
        %1899 = vmatmul.f32.gmra.mxu0 %v876
        %v1900 = vpop.f32.mrf.mxu0
        %v1901 = vadd.f32 0.0, %v1900
        %1902 = vmatmul.f32.gmra.mxu0 %v878
        %v1903 = vpop.f32.mrf.mxu0
        %v1904 = vadd.f32 0.0, %v1903
        %1905 = vmatmul.f32.gmra.mxu0 %v880
        %v1906 = vpop.f32.mrf.mxu0
        %v1907 = vadd.f32 0.0, %v1906
        %1908 = vmatmul.f32.gmra.mxu0 %v882
        %v1909 = vpop.f32.mrf.mxu0
        %v1910 = vadd.f32 0.0, %v1909
        %1911 = vmatmul.f32.gmra.mxu0 %v884
        %v1912 = vpop.f32.mrf.mxu0
        %v1913 = vadd.f32 0.0, %v1912
        %1914 = vmatmul.f32.gmra.mxu0 %v886
        %v1915 = vpop.f32.mrf.mxu0
        %v1916 = vadd.f32 0.0, %v1915
        %1917 = vmatmul.f32.gmra.mxu0 %v888
        %v1918 = vpop.f32.mrf.mxu0
        %v1919 = vadd.f32 0.0, %v1918
        %1920 = vmatmul.f32.gmra.mxu0 %v890
        %v1921 = vpop.f32.mrf.mxu0
        %v1922 = vadd.f32 0.0, %v1921
        %1923 = vmatmul.f32.gmra.mxu0 %v892
        %v1924 = vpop.f32.mrf.mxu0
        %v1925 = vadd.f32 0.0, %v1924
        %1926 = vmatmul.f32.gmra.mxu0 %v894
        %v1927 = vpop.f32.mrf.mxu0
        %v1928 = vadd.f32 0.0, %v1927
        %1929 = vmatmul.f32.gmra.mxu0 %v896
        %v1930 = vpop.f32.mrf.mxu0
        %v1931 = vadd.f32 0.0, %v1930
        %1932 = vmatmul.f32.gmra.mxu0 %v898
        %v1933 = vpop.f32.mrf.mxu0
        %v1934 = vadd.f32 0.0, %v1933
        %1935 = vmatmul.f32.gmra.mxu0 %v900
        %v1936 = vpop.f32.mrf.mxu0
        %v1937 = vadd.f32 0.0, %v1936
        %1938 = vmatmul.f32.gmra.mxu0 %v902
        %v1939 = vpop.f32.mrf.mxu0
        %v1940 = vadd.f32 0.0, %v1939
        %1941 = vmatmul.f32.gmra.mxu0 %v904
        %v1942 = vpop.f32.mrf.mxu0
        %v1943 = vadd.f32 0.0, %v1942
        %1944 = vmatmul.f32.gmra.mxu0 %v906
        %v1945 = vpop.f32.mrf.mxu0
        %v1946 = vadd.f32 0.0, %v1945
        %1947 = vmatmul.f32.gmra.mxu0 %v908
        %v1948 = vpop.f32.mrf.mxu0
        %v1949 = vadd.f32 0.0, %v1948
        %1950 = vmatmul.f32.gmra.mxu0 %v910
        %v1951 = vpop.f32.mrf.mxu0
        %v1952 = vadd.f32 0.0, %v1951
        %1953 = vmatmul.f32.gmra.mxu0 %v1377
        %v1954 = vpop.f32.mrf.mxu0
        %v1955 = vadd.f32 0.0, %v1954
        %1956 = vmatmul.f32.gmra.mxu0 %v1379
        %v1957 = vpop.f32.mrf.mxu0
        %v1958 = vadd.f32 0.0, %v1957
        %1959 = vmatmul.f32.gmra.mxu0 %v1846
        %v1960 = vpop.f32.mrf.mxu0
        %v1961 = vadd.f32 0.0, %v1960
        %1962 = vmatmul.f32.gmra.mxu0 %v1848
        %v1963 = vpop.f32.mrf.mxu0
        %v1964 = vadd.f32 0.0, %v1963
        %1965 = vdwg.mxu0
        %v1966 = vadd.f32 %v1809, %v1871
        %v1967 = vadd.f32 %v1810, %v1874
        %v1968 = vadd.f32 %v1811, %v1877
        %v1969 = vadd.f32 %v1812, %v1880
        %v1970 = vadd.f32 %v1813, %v1883
        %v1971 = vadd.f32 %v1814, %v1886
        %v1972 = vadd.f32 %v1815, %v1889
        %v1973 = vadd.f32 %v1816, %v1892
        %v1974 = vadd.f32 %v1817, %v1895
        %v1975 = vadd.f32 %v1818, %v1898
        %v1976 = vadd.f32 %v1819, %v1901
        %v1977 = vadd.f32 %v1820, %v1904
        %v1978 = vadd.f32 %v1821, %v1907
        %v1979 = vadd.f32 %v1822, %v1910
        %v1980 = vadd.f32 %v1823, %v1913
        %v1981 = vadd.f32 %v1824, %v1916
        %v1982 = vadd.f32 %v1825, %v1919
        %v1983 = vadd.f32 %v1826, %v1922
        %v1984 = vadd.f32 %v1827, %v1925
        %v1985 = vadd.f32 %v1828, %v1928
        %v1986 = vadd.f32 %v1829, %v1931
        %v1987 = vadd.f32 %v1830, %v1934
        %v1988 = vadd.f32 %v1831, %v1937
        %v1989 = vadd.f32 %v1832, %v1940
        %v1990 = vadd.f32 %v1833, %v1943
        %v1991 = vadd.f32 %v1834, %v1946
        %v1992 = vadd.f32 %v1835, %v1949
        %v1993 = vadd.f32 %v1836, %v1952
        %v1994 = vadd.f32 %v1837, %v1955
        %v1995 = vadd.f32 %v1838, %v1958
        %v1996 = vadd.f32 %v1839, %v1961
        %v1997 = vadd.f32 %v1840, %v1964
        %v1998 = vld [vmem:[%s189] sm:$0xff]
        %1999 = vmatpush.msra.mxu0 %v1981
        %2000 = vmatpush.msra.mxu0 %v1980
        %2001 = vmatpush.msra.mxu0 %v1979
        %2002 = vmatpush.msra.mxu0 %v1978
        %2003 = vmatpush.msra.mxu0 %v1977
        %2004 = vmatpush.msra.mxu0 %v1976
        %2005 = vmatpush.msra.mxu0 %v1975
        %2006 = vmatpush.msra.mxu0 %v1974
        %2007 = vmatpush.msra.mxu0 %v1973
        %2008 = vmatpush.msra.mxu0 %v1972
        %2009 = vmatpush.msra.mxu0 %v1971
        %2010 = vmatpush.msra.mxu0 %v1970
        %2011 = vmatpush.msra.mxu0 %v1969
        %2012 = vmatpush.msra.mxu0 %v1968
        %2013 = vmatpush.msra.mxu0 %v1967
        %2014 = vmatpush.msra.mxu0 %v1966
        %2015 = vmatmul.f32.gmra.mxu0 1.0
        %v2016 = vpop.f32.mrf.mxu0
        %v2017 = vadd.f32 0.0, %v2016
        %2018 = vdwg.mxu0
        %2019 = vmatpush.msra.mxu0 %v1997
        %2020 = vmatpush.msra.mxu0 %v1996
        %2021 = vmatpush.msra.mxu0 %v1995
        %2022 = vmatpush.msra.mxu0 %v1994
        %2023 = vmatpush.msra.mxu0 %v1993
        %2024 = vmatpush.msra.mxu0 %v1992
        %2025 = vmatpush.msra.mxu0 %v1991
        %2026 = vmatpush.msra.mxu0 %v1990
        %2027 = vmatpush.msra.mxu0 %v1989
        %2028 = vmatpush.msra.mxu0 %v1988
        %2029 = vmatpush.msra.mxu0 %v1987
        %2030 = vmatpush.msra.mxu0 %v1986
        %2031 = vmatpush.msra.mxu0 %v1985
        %2032 = vmatpush.msra.mxu0 %v1984
        %2033 = vmatpush.msra.mxu0 %v1983
        %2034 = vmatpush.msra.mxu0 %v1982
        %2035 = vmatmul.f32.gmra.mxu0 1.0
        %v2036 = vpop.f32.mrf.mxu0
        %v2037 = vadd.f32 %v2017, %v2036
        %2038 = vdwg.mxu0
        %v2039 = vadd.f32 %v1998, %v2037
        %vm2040 = vcmask 64512
        %2041 = vst.msk [vmem:[%s189] sm:$0xff] %vm2040, %v2039
        %v2042 = vld [vmem:[%s196] sm:$0xff]
        %v2043 = vmul.f32 %v1966, %v1966
        %v2044 = vmul.f32 %v1967, %v1967
        %v2045 = vmul.f32 %v1968, %v1968
        %v2046 = vmul.f32 %v1969, %v1969
        %v2047 = vmul.f32 %v1970, %v1970
        %v2048 = vmul.f32 %v1971, %v1971
        %v2049 = vmul.f32 %v1972, %v1972
        %v2050 = vmul.f32 %v1973, %v1973
        %v2051 = vmul.f32 %v1974, %v1974
        %v2052 = vmul.f32 %v1975, %v1975
        %v2053 = vmul.f32 %v1976, %v1976
        %v2054 = vmul.f32 %v1977, %v1977
        %v2055 = vmul.f32 %v1978, %v1978
        %v2056 = vmul.f32 %v1979, %v1979
        %v2057 = vmul.f32 %v1980, %v1980
        %v2058 = vmul.f32 %v1981, %v1981
        %v2059 = vmul.f32 %v1982, %v1982
        %v2060 = vmul.f32 %v1983, %v1983
        %v2061 = vmul.f32 %v1984, %v1984
        %v2062 = vmul.f32 %v1985, %v1985
        %v2063 = vmul.f32 %v1986, %v1986
        %v2064 = vmul.f32 %v1987, %v1987
        %v2065 = vmul.f32 %v1988, %v1988
        %v2066 = vmul.f32 %v1989, %v1989
        %v2067 = vmul.f32 %v1990, %v1990
        %v2068 = vmul.f32 %v1991, %v1991
        %v2069 = vmul.f32 %v1992, %v1992
        %v2070 = vmul.f32 %v1993, %v1993
        %v2071 = vmul.f32 %v1994, %v1994
        %v2072 = vmul.f32 %v1995, %v1995
        %v2073 = vmul.f32 %v1996, %v1996
        %v2074 = vmul.f32 %v1997, %v1997
        %2075 = vmatpush.msra.mxu0 %v2058
        %2076 = vmatpush.msra.mxu0 %v2057
        %2077 = vmatpush.msra.mxu0 %v2056
        %2078 = vmatpush.msra.mxu0 %v2055
        %2079 = vmatpush.msra.mxu0 %v2054
        %2080 = vmatpush.msra.mxu0 %v2053
        %2081 = vmatpush.msra.mxu0 %v2052
        %2082 = vmatpush.msra.mxu0 %v2051
        %2083 = vmatpush.msra.mxu0 %v2050
        %2084 = vmatpush.msra.mxu0 %v2049
        %2085 = vmatpush.msra.mxu0 %v2048
        %2086 = vmatpush.msra.mxu0 %v2047
        %2087 = vmatpush.msra.mxu0 %v2046
        %2088 = vmatpush.msra.mxu0 %v2045
        %2089 = vmatpush.msra.mxu0 %v2044
        %2090 = vmatpush.msra.mxu0 %v2043
        %2091 = vmatmul.f32.gmra.mxu0 1.0
        %v2092 = vpop.f32.mrf.mxu0
        %v2093 = vadd.f32 0.0, %v2092
        %2094 = vdwg.mxu0
        %2095 = vmatpush.msra.mxu0 %v2074
        %2096 = vmatpush.msra.mxu0 %v2073
        %2097 = vmatpush.msra.mxu0 %v2072
        %2098 = vmatpush.msra.mxu0 %v2071
        %2099 = vmatpush.msra.mxu0 %v2070
        %2100 = vmatpush.msra.mxu0 %v2069
        %2101 = vmatpush.msra.mxu0 %v2068
        %2102 = vmatpush.msra.mxu0 %v2067
        %2103 = vmatpush.msra.mxu0 %v2066
        %2104 = vmatpush.msra.mxu0 %v2065
        %2105 = vmatpush.msra.mxu0 %v2064
        %2106 = vmatpush.msra.mxu0 %v2063
        %2107 = vmatpush.msra.mxu0 %v2062
        %2108 = vmatpush.msra.mxu0 %v2061
        %2109 = vmatpush.msra.mxu0 %v2060
        %2110 = vmatpush.msra.mxu0 %v2059
        %2111 = vmatmul.f32.gmra.mxu0 1.0
        %v2112 = vpop.f32.mrf.mxu0
        %v2113 = vadd.f32 %v2093, %v2112
        %2114 = vdwg.mxu0
        %v2115 = vadd.f32 %v2042, %v2113
        %2116 = vst.msk [vmem:[%s196] sm:$0xff] %vm2040, %v2115
        %s2117 = sand.u32 %s90, 1
        %s2118 = scalar_lea.sflag [#allocation3], %s2117
        %s2119 = sand.u32 %s90, 1
        %s2120 = smul.addr %s2119, 8
        %s2121 = scalar_lea.vmem [#allocation2], %s2120
        %s2122 = sand.u32 %s116, 1
        %s2123 = scalar_lea.sflag [#allocation5], %s2122
        %s2124 = sand.u32 %s116, 1
        %s2125 = smul.addr %s2124, 8
        %s2126 = scalar_lea.vmem [#allocation4], %s2125
        // Predicated region
        $region33: #{tpu_custom_call.1} parent=27 // pred_check
          %p2127 = pneg %p100
        $region34: #{tpu_custom_call.1} parent=27 // pred_check_branch
          %2129 = sbr.rel (%p2127) target = $region36
        $region35: #{tpu_custom_call.1} parent=27 // pred_region
          %2131 = vsyncadd %s2118, 0
          %s2132 = smul.addr %s25, 8
          %s2133 = scalar_lea.hbm %s2, %s2132
          %s2135 = sshll.u32 %s2121, 4
          %s2136 = int_to_ptr.vmem [resolvable:$true] %s2135
          %s2137 = sshll.u32 %s2133, 4
          %s2138 = int_to_ptr.hbm [resolvable:$true] %s2137
          %2140 = dma.vmem_to_hbm [thread:$0]  %s2136, 128, %s2138, %s2118
        $region36: #{tpu_custom_call.1} parent=27 // pred_fallthru
          _
        // Predicated region
        $region37: #{tpu_custom_call.1} parent=27 // pred_check
          %p2141 = pneg %p126
        $region38: #{tpu_custom_call.1} parent=27 // pred_check_branch
          %2143 = sbr.rel (%p2141) target = $region40
        $region39: #{tpu_custom_call.1} parent=27 // pred_region
          %2145 = vsyncadd %s2123, 0
          %s2146 = smul.addr %s25, 8
          %s2147 = scalar_lea.hbm %s3, %s2146
          %s2149 = sshll.u32 %s2126, 4
          %s2150 = int_to_ptr.vmem [resolvable:$true] %s2149
          %s2151 = sshll.u32 %s2147, 4
          %s2152 = int_to_ptr.hbm [resolvable:$true] %s2151
          %2154 = dma.vmem_to_hbm [thread:$0]  %s2150, 128, %s2152, %s2123
        $region40: #{tpu_custom_call.1} parent=27 // pred_fallthru
          _
      $region28: #{tpu_custom_call.1} parent=5 // pred_fallthru
        _
      %p2155 = scmp.le.s32.totalorder 2, %s16
      // Predicated region
      $region41: #{tpu_custom_call.1} parent=5 // pred_check
        %p2156 = pneg %p2155
      $region42: #{tpu_custom_call.1} parent=5 // pred_check_branch
        %2158 = sbr.rel (%p2156) target = $region44
      $region43: #{tpu_custom_call.1} parent=5 // pred_region
        %s2159 = ssub.s32 %s16, 2
        // Predicated region
        $region45: #{tpu_custom_call.1} parent=43 // pred_check
          %p2160 = pneg %p106
        $region46: #{tpu_custom_call.1} parent=43 // pred_check_branch
          %2162 = sbr.rel (%p2160) target = $region48
        $region47: #{tpu_custom_call.1} parent=43 // pred_region
          %s2163 = sand.u32 %s91, 1
          %s2164 = scalar_lea.sflag [#allocation3], %s2163
          %s2165 = sand.u32 %s91, 1
          %s2166 = smul.addr %s2165, 8
          %s2167 = scalar_lea.vmem [#allocation2], %s2166
          %2169 = dma.done %s2164, 128
        $region48: #{tpu_custom_call.1} parent=43 // pred_fallthru
          _
        // Predicated region
        $region49: #{tpu_custom_call.1} parent=43 // pred_check
          %p2170 = pneg %p132
        $region50: #{tpu_custom_call.1} parent=43 // pred_check_branch
          %2172 = sbr.rel (%p2170) target = $region52
        $region51: #{tpu_custom_call.1} parent=43 // pred_region
          %s2173 = sand.u32 %s117, 1
          %s2174 = scalar_lea.sflag [#allocation5], %s2173
          %s2175 = sand.u32 %s117, 1
          %s2176 = smul.addr %s2175, 8
          %s2177 = scalar_lea.vmem [#allocation4], %s2176
          %2179 = dma.done %s2174, 128
        $region52: #{tpu_custom_call.1} parent=43 // pred_fallthru
          _
      $region44: #{tpu_custom_call.1} parent=5 // pred_fallthru
        _
    $region6: #{tpu_custom_call.1} parent=1 // loop_footer
      %s20 = sadd.s32 1, %s16
    $region7: #{tpu_custom_call.1} parent=1 // loop_footer_branch
      %15 = sbr.rel target = $region3
    $region8: #{tpu_custom_call.1} parent=1 // loop_exit
      _
    %2180 = vsyncpa [#allocation3], 1
    %s2181 = scalar_lea.sflag [#allocation3], 1
    %2182 = vsyncpa %s2181, 1
    %2183 = vsyncpa [#allocation5], 1
    %s2184 = scalar_lea.sflag [#allocation5], 1
    %2185 = vsyncpa %s2184, 1

</llo_original>
